<compile_context>
chip_gen: v7x
topology: tpu7x:2x2x1
jax: 0.10.0
libtpu: 0.0.40
codegen_flags: <defaults>
</compile_context>

<pallas_src>
import functools

import jax
import jax.numpy as jnp
from jax.experimental import pallas as pl
from jax.experimental.pallas import tpu as pltpu

IN_FEATURES = 9216
HIDDEN = 512
OUT_FEATURES = 1
OUT_PAD = 128          # lane-dense padded output width
TK = 1152              # 9216 / 1152 = 8 reduction steps


# ----------------------------------------------------------------------------
# Fused Pallas kernel:  o = (relu(x @ W1 + b1)) @ W2 + b2
# Grid = (M tiles [parallel], K tiles [arbitrary / reduction])
# ----------------------------------------------------------------------------
def _critic_kernel(x_ref, w1_ref, b1_ref, w2_ref, b2_ref, o_ref, acc_ref):
    k = pl.program_id(1)

    @pl.when(k == 0)
    def _init():
        acc_ref[...] = jnp.zeros_like(acc_ref)

    # fc1 partial accumulation in f32 (bf16 operands on the MXU).
    acc_ref[...] += jnp.dot(x_ref[...], w1_ref[...],
                            preferred_element_type=jnp.float32)

    @pl.when(k == pl.num_programs(1) - 1)
    def _finish():
        h = jnp.maximum(acc_ref[...] + b1_ref[...], 0.0)          # (tm, 512) f32
        y = jnp.dot(h.astype(jnp.bfloat16), w2_ref[...],          # (tm, 128) f32
                    preferred_element_type=jnp.float32)
        o_ref[...] = (y + b2_ref[...]).astype(o_ref.dtype)


def critic_forward_pallas(packed, x):
    """packed: pre-packed params (see pack_params). x: any shape with
    numel % 9216 == 0 (matches torch's x.view(-1, 9216))."""
    x2 = x.reshape(-1, IN_FEATURES).astype(jnp.bfloat16)
    B = x2.shape[0]

    # M tiling: one resident block for small batches, 256-row tiles otherwise.
    if B <= 256:
        tm, Mp = B, B
    else:
        tm = 256
        Mp = pl.cdiv(B, tm) * tm
        x2 = jnp.pad(x2, ((0, Mp - B), (0, 0)))

    grid = (Mp // tm, IN_FEATURES // TK)

    out = pl.pallas_call(
        _critic_kernel,
        out_shape=jax.ShapeDtypeStruct((Mp, OUT_PAD), jnp.float32),
        grid=grid,
        in_specs=[
            pl.BlockSpec((tm, TK), lambda i, k: (i, k)),          # x tile
            pl.BlockSpec((TK, HIDDEN), lambda i, k: (k, 0)),      # W1 tile (streamed)
            pl.BlockSpec((1, HIDDEN), lambda i, k: (0, 0)),       # b1 (resident)
            pl.BlockSpec((HIDDEN, OUT_PAD), lambda i, k: (0, 0)),  # W2 padded (resident)
            pl.BlockSpec((1, OUT_PAD), lambda i, k: (0, 0)),      # b2 padded (resident)
        ],
        out_specs=pl.BlockSpec((tm, OUT_PAD), lambda i, k: (i, 0)),
        scratch_shapes=[pltpu.VMEM((tm, HIDDEN), jnp.float32)],   # fc1 accumulator
        compiler_params=pltpu.CompilerParams(
            dimension_semantics=("parallel", "arbitrary"),
            vmem_limit_bytes=32 * 1024 * 1024,
        ),
    )(x2, packed["w1"], packed["b1"], packed["w2"], packed["b2"])

    return out[:B, :OUT_FEATURES]                                 # (B, 1) f32


# ----------------------------------------------------------------------------
# Parameters (PyTorch-shaped masters) + one-time packing for the kernel
# ----------------------------------------------------------------------------
def init_params(key):
    def uniform(k, shape, fan_in):
        bound = 1.0 / jnp.sqrt(jnp.float32(fan_in))
        return jax.random.uniform(k, shape, jnp.float32, -bound, bound)

    ks = jax.random.split(key, 4)
    return {
        "fc1_w": uniform(ks[0], (HIDDEN, IN_FEATURES), IN_FEATURES),  # (512, 9216)
        "fc1_b": uniform(ks[1], (HIDDEN,), IN_FEATURES),
        "fc2_w": uniform(ks[2], (OUT_FEATURES, HIDDEN), HIDDEN),      # (1, 512)
        "fc2_b": uniform(ks[3], (OUT_FEATURES,), HIDDEN),
    }


def pack_params(params):
    """Pre-transpose, pad and bf16-cast the weights once (not per forward)."""
    w1 = params["fc1_w"].T.astype(jnp.bfloat16)                       # (9216, 512)
    b1 = params["fc1_b"].reshape(1, HIDDEN).astype(jnp.float32)
    w2 = jnp.zeros((HIDDEN, OUT_PAD), jnp.float32)
    w2 = w2.at[:, :OUT_FEATURES].set(params["fc2_w"].T).astype(jnp.bfloat16)
    b2 = jnp.zeros((1, OUT_PAD), jnp.float32)
    b2 = b2.at[:, :OUT_FEATURES].set(params["fc2_b"].reshape(1, OUT_FEATURES))
    return {"w1": w1, "b1": b1, "w2": w2, "b2": b2}


# ----------------------------------------------------------------------------
# Pure-JAX f32 reference (PyTorch semantics) for a sanity check
# ----------------------------------------------------------------------------
def reference_forward(params, x):
    x2 = x.reshape(-1, IN_FEATURES)
    h = jax.nn.relu(x2 @ params["fc1_w"].T + params["fc1_b"])
    return h @ params["fc2_w"].T + params["fc2_b"]


if __name__ == "__main__":
    key = jax.random.PRNGKey(0)
    k_params, k_x = jax.random.split(key)

    params = init_params(k_params)
    packed = pack_params(params)

    # Small input consistent with the module: (4, 64, 12, 12) -> view(-1, 9216)
    x = jax.random.normal(k_x, (4, 64, 12, 12), dtype=jnp.float32)

    fwd = jax.jit(critic_forward_pallas)
    out = jax.block_until_ready(fwd(packed, x))
    assert out.shape == (4, 1) and out.dtype == jnp.float32, out.shape

    ref = jax.block_until_ready(reference_forward(params, x))
    # bf16 weights/activations with f32 accumulation -> small numeric delta.
    assert jnp.allclose(out, ref, rtol=2e-2, atol=2e-2), (out, ref)

    print("KERNEL_OK")
</pallas_src>

<mosaic_0001>
module attributes {stable_mosaic.version = 11 : i64} {
  func.func @_critic_kernel(%arg0: i32, %arg1: i32, %arg2: memref<4x1152xbf16, #tpu.memory_space<vmem>>, %arg3: memref<1152x512xbf16, #tpu.memory_space<vmem>>, %arg4: memref<1x512xf32, #tpu.memory_space<vmem>>, %arg5: memref<512x128xbf16, #tpu.memory_space<vmem>>, %arg6: memref<1x128xf32, #tpu.memory_space<vmem>>, %arg7: memref<4x128xf32, #tpu.memory_space<vmem>>, %arg8: memref<4x512xf32, #tpu.memory_space<vmem>>) attributes {dimension_semantics = [#tpu.dimension_semantics<parallel>, #tpu.dimension_semantics<arbitrary>], iteration_bounds = array<i64: 1, 8>, scalar_prefetch = 0 : i64, scratch_operands = 1 : i64, tpu.core_type = #tpu.core_type<tc>, window_params = [{transform_indices = @transform_0, window_bounds = array<i64: 4, 1152>}, {transform_indices = @transform_1, window_bounds = array<i64: 1152, 512>}, {pipeline_mode = #tpu.pipeline_mode<synchronous>, transform_indices = @transform_2, window_bounds = array<i64: 1, 512>}, {pipeline_mode = #tpu.pipeline_mode<synchronous>, transform_indices = @transform_3, window_bounds = array<i64: 512, 128>}, {pipeline_mode = #tpu.pipeline_mode<synchronous>, transform_indices = @transform_4, window_bounds = array<i64: 1, 128>}, {transform_indices = @transform_5, window_bounds = array<i64: 4, 128>}]} {
    %c0_i32 = arith.constant 0 : i32
    %0 = arith.cmpi eq, %arg1, %c0_i32 : i32
    %1 = arith.extui %0 : i1 to i32
    %c0_i32_0 = arith.constant 0 : i32
    %2 = arith.cmpi ne, %1, %c0_i32_0 : i32
    scf.if %2 {
      %cst_9 = arith.constant 0.000000e+00 : f32
      %12 = vector.broadcast %cst_9 : f32 to vector<4x512xf32>
      %c0_10 = arith.constant 0 : index
      %c0_11 = arith.constant 0 : index
      %13 = vector.load %arg8[%c0_10, %c0_11] : memref<4x512xf32, #tpu.memory_space<vmem>>, vector<4x512xf32>
      tpu.vector_store %arg8[%c0_10, %c0_11], %12 {strides = array<i32>} : memref<4x512xf32, #tpu.memory_space<vmem>>, vector<4x512xf32>,
    } else {
    }
    %c0 = arith.constant 0 : index
    %c0_1 = arith.constant 0 : index
    %3 = vector.load %arg8[%c0, %c0_1] : memref<4x512xf32, #tpu.memory_space<vmem>>, vector<4x512xf32>
    %c0_2 = arith.constant 0 : index
    %c0_3 = arith.constant 0 : index
    %4 = vector.load %arg2[%c0_2, %c0_3] : memref<4x1152xbf16, #tpu.memory_space<vmem>>, vector<4x1152xbf16>
    %c0_4 = arith.constant 0 : index
    %c0_5 = arith.constant 0 : index
    %5 = vector.load %arg3[%c0_4, %c0_5] : memref<1152x512xbf16, #tpu.memory_space<vmem>>, vector<1152x512xbf16>
    %cst = arith.constant dense<0.000000e+00> : vector<4x512xf32>
    %6 = tpu.matmul %4, %5, %cst {dimension_numbers = #tpu.dot_dimension_numbers<[1], [0], [0], [1], [0, 0, 1, 1], [], []>} : vector<4x1152xbf16>, vector<1152x512xbf16>, vector<4x512xf32> -> vector<4x512xf32>
    %7 = arith.addf %3, %6 : vector<4x512xf32>
    %c0_6 = arith.constant 0 : index
    %c0_7 = arith.constant 0 : index
    %8 = vector.load %arg8[%c0_6, %c0_7] : memref<4x512xf32, #tpu.memory_space<vmem>>, vector<4x512xf32>
    tpu.vector_store %arg8[%c0_6, %c0_7], %7 {strides = array<i32>} : memref<4x512xf32, #tpu.memory_space<vmem>>, vector<4x512xf32>,
    %c7_i32 = arith.constant 7 : i32
    %9 = arith.cmpi eq, %arg1, %c7_i32 : i32
    %10 = arith.extui %9 : i1 to i32
    %c0_i32_8 = arith.constant 0 : i32
    %11 = arith.cmpi ne, %10, %c0_i32_8 : i32
    scf.if %11 {
      %c0_9 = arith.constant 0 : index
      %c0_10 = arith.constant 0 : index
      %12 = vector.load %arg8[%c0_9, %c0_10] : memref<4x512xf32, #tpu.memory_space<vmem>>, vector<4x512xf32>
      %c0_11 = arith.constant 0 : index
      %c0_12 = arith.constant 0 : index
      %13 = vector.load %arg4[%c0_11, %c0_12] : memref<1x512xf32, #tpu.memory_space<vmem>>, vector<1x512xf32>
      %14 = vector.broadcast %13 : vector<1x512xf32> to vector<4x512xf32>
      %15 = arith.addf %12, %14 : vector<4x512xf32>
      %cst_13 = arith.constant 0.000000e+00 : f32
      %16 = vector.broadcast %cst_13 : f32 to vector<4x512xf32>
      %17 = arith.maximumf %15, %16 : vector<4x512xf32>
      %18 = arith.truncf %17 : vector<4x512xf32> to vector<4x512xbf16>
      %c0_14 = arith.constant 0 : index
      %c0_15 = arith.constant 0 : index
      %19 = vector.load %arg5[%c0_14, %c0_15] : memref<512x128xbf16, #tpu.memory_space<vmem>>, vector<512x128xbf16>
      %cst_16 = arith.constant dense<0.000000e+00> : vector<4x128xf32>
      %20 = tpu.matmul %18, %19, %cst_16 {dimension_numbers = #tpu.dot_dimension_numbers<[1], [0], [0], [1], [0, 0, 1, 1], [], []>} : vector<4x512xbf16>, vector<512x128xbf16>, vector<4x128xf32> -> vector<4x128xf32>
      %c0_17 = arith.constant 0 : index
      %c0_18 = arith.constant 0 : index
      %21 = vector.load %arg6[%c0_17, %c0_18] : memref<1x128xf32, #tpu.memory_space<vmem>>, vector<1x128xf32>
      %22 = vector.broadcast %21 : vector<1x128xf32> to vector<4x128xf32>
      %23 = arith.addf %20, %22 : vector<4x128xf32>
      %c0_19 = arith.constant 0 : index
      %c0_20 = arith.constant 0 : index
      %24 = vector.load %arg7[%c0_19, %c0_20] : memref<4x128xf32, #tpu.memory_space<vmem>>, vector<4x128xf32>
      tpu.vector_store %arg7[%c0_19, %c0_20], %23 {strides = array<i32>} : memref<4x128xf32, #tpu.memory_space<vmem>>, vector<4x128xf32>,
    } else {
    }
    return
  }
  func.func @transform_0(%arg0: i32, %arg1: i32) -> (i32, i32) {
    %c0_i32 = arith.constant 0 : i32
    return %arg0, %arg1 : i32, i32
  }
  func.func @transform_1(%arg0: i32, %arg1: i32) -> (i32, i32) {
    %c0_i32 = arith.constant 0 : i32
    %c0_i32_0 = arith.constant 0 : i32
    return %arg1, %c0_i32 : i32, i32
  }
  func.func @transform_2(%arg0: i32, %arg1: i32) -> (i32, i32) {
    %c0_i32 = arith.constant 0 : i32
    %c0_i32_0 = arith.constant 0 : i32
    %c0_i32_1 = arith.constant 0 : i32
    return %c0_i32, %c0_i32_0 : i32, i32
  }
  func.func @transform_3(%arg0: i32, %arg1: i32) -> (i32, i32) {
    %c0_i32 = arith.constant 0 : i32
    %c0_i32_0 = arith.constant 0 : i32
    %c0_i32_1 = arith.constant 0 : i32
    return %c0_i32, %c0_i32_0 : i32, i32
  }
  func.func @transform_4(%arg0: i32, %arg1: i32) -> (i32, i32) {
    %c0_i32 = arith.constant 0 : i32
    %c0_i32_0 = arith.constant 0 : i32
    %c0_i32_1 = arith.constant 0 : i32
    return %c0_i32, %c0_i32_0 : i32, i32
  }
  func.func @transform_5(%arg0: i32, %arg1: i32) -> (i32, i32) {
    %c0_i32 = arith.constant 0 : i32
    %c0_i32_0 = arith.constant 0 : i32
    return %arg0, %c0_i32 : i32, i32
  }
}

</mosaic_0001>

<llo_original>
// kernel: critic_forward_pallas.1
$region0: #{critic_forward_pallas.1}
  #allocation0 [shape = 'u32[]', space=smem, size = 0x4, offset = 0x4, fixed_abs, tag = 'smem constant byte address 0x4 - core index']
  #allocation1 [shape = 'u32[144,128]{1,0:T(1,128)}', space=vmem, size = 0x12000, scoped, tag = 'internal scratch']
  #allocation2 [shape = 'f32[4,512]{1,0:T(4,128)}', space=vmem, size = 0x2000, scoped, tag = 'scratch operand']
  %s0 = inlined_call_operand.vmem [shape: bf16[4,9216], index: 0, kind: input, shape index: {}]
  %s1 = inlined_call_operand.hbm [shape: bf16[9216,512], index: 1, kind: input, shape index: {}]
  %s2 = inlined_call_operand.hbm [shape: f32[1,512], index: 2, kind: input, shape index: {}]
  %s3 = inlined_call_operand.hbm [shape: bf16[512,128], index: 3, kind: input, shape index: {}]
  %s4 = inlined_call_operand.hbm [shape: f32[1,128], index: 4, kind: input, shape index: {}]
  %s5 = inlined_call_operand.vmem [shape: f32[4,128], index: 5, kind: output, shape index: {}]
  %s6 = sld [smem:[#allocation0]]
  $region77: #{critic_forward_pallas.1} parent=0
    _
  %s8 = ssub.s32 1, %s6
  %s9 = scalar_select 0, %s8, %s6
  $region1: #{critic_forward_pallas.1} parent=0
    #allocation3 [shape = 'u8[2359296]{0}', space=vmem, size = 0x240000, scoped, tag = 'input window, operand 1']
    #allocation4 [shape = 's32[2]{0}', space=sflag, size = 0x8, scoped, tag = 'scoped memory for critic_forward_pallas.1']
    #allocation5 [shape = 'u8[2048]{0}', space=vmem, size = 0x800, scoped, tag = 'input window, operand 2, single buffered']
    #allocation6 [shape = 's32[1]{0}', space=sflag, size = 0x4, scoped, tag = 'scoped memory for critic_forward_pallas.1']
    #allocation7 [shape = 'u8[131072]{0}', space=vmem, size = 0x20000, scoped, tag = 'input window, operand 3, single buffered']
    #allocation8 [shape = 'u8[512]{0}', space=vmem, size = 0x400, scoped, tag = 'input window, operand 4, single buffered']
    #allocation9 [shape = 's32[1]{0}', space=sflag, size = 0x4, scoped, tag = 'scoped memory for critic_forward_pallas.1']
    %10 = vsyncpa [#allocation4], 0
    %s11 = scalar_lea.sflag [#allocation4], 1
    %12 = vsyncpa %s11, 0
    %13 = vsyncpa [#allocation6], 0
    %14 = vsyncpa [#allocation9], 0
    loop: start=0, step=1, limit=10
    $region2: #{critic_forward_pallas.1} parent=1 // loop_pre_header
      _
    $region3: #{critic_forward_pallas.1} parent=1 // loop_header
      %s16 = sphi 0, %s20
      %p17 = scmp.ge.s32.totalorder %s16, 10
      %s23 = sphi 0, %s35
      %s24 = sphi 0, %s31
      %s25 = sphi 0, %s23
      %s26 = sphi 0, %s24
      %s27 = sphi 0, %s25
      %s28 = sphi 0, %s26
      %s40 = sphi 0, %s42
      %s43 = sphi 0, %s40
      %s44 = sphi 0, %s43
      %s60 = sphi 0, %s44
      %s66 = sphi 0, %s68
      %s69 = sphi 0, %s66
      %s70 = sphi 0, %s69
      %s86 = sphi 0, %s70
      %s90 = sphi 0, %s90
      %s92 = sphi 0, %s90
      %s93 = sphi 0, %s92
      %s107 = sphi 0, %s93
      %s111 = sphi 0, %s111
      %s113 = sphi 0, %s111
      %s114 = sphi 0, %s113
      %s128 = sphi 0, %s114
      %s132 = sphi 0, %s132
      %s134 = sphi 0, %s132
      %s135 = sphi 0, %s134
      %s149 = sphi 0, %s135
      %s155 = sphi 0, %s157
      %s158 = sphi 0, %s155
      %s159 = sphi 0, %s158
      %s175 = sphi 0, %s159
    $region4: #{critic_forward_pallas.1} parent=1 // loop_header_branch
      %19 = sbr.rel (%p17) target = $region8
    $region5: #{critic_forward_pallas.1} parent=1 // loop_body
      %s21 = ssub.s32 %s16, 1
      %s22 = ssub.s32 %s16, 2
      %s29 = sadd.s32 1, %s24
      %p30 = scmp.ge.s32.totalorder %s29, 8
      %s31 = scalar_select %p30, 0, %s29
      %s32 = sadd.s32 1, %s23
      %s33 = scalar_select %p30, %s32, %s23
      %p34 = scmp.ge.s32.totalorder %s33, 1
      %s35 = scalar_select %p34, 0, %s33
      %s36 = ssub.s32 %s23, %s35
      %s37 = ssub.s32 %s24, %s31
      %s38 = sor.u32 %s36, %s37
      %p39 = scmp.eq.s32.totalorder %s38, 0
      %s41 = sadd.s32 %s40, 1
      %s42 = scalar_select %p39, %s40, %s41
      %p45 = pneg %p39
      %p46 = scmp.eq.s32.totalorder %s16, 7
      %p47 = por %p45, %p46
      %p48 = scmp.ne.s32.totalorder %s40, %s43
      %p49 = scmp.eq.s32.totalorder %s16, 0
      %p50 = por %p48, %p49
      %p51 = scmp.ne.s32.totalorder %s40, %s43
      %p52 = scmp.eq.s32.totalorder %s21, 7
      %p53 = por %p51, %p52
      %p54 = scmp.ne.s32.totalorder %s43, %s44
      %p55 = scmp.eq.s32.totalorder %s21, 0
      %p56 = por %p54, %p55
      %p57 = scmp.ne.s32.totalorder %s43, %s44
      %p58 = scmp.eq.s32.totalorder %s22, 7
      %p59 = por %p57, %p58
      %p61 = scmp.ne.s32.totalorder %s44, %s60
      %p62 = scmp.eq.s32.totalorder %s22, 0
      %p63 = por %p61, %p62
      %s64 = ssub.s32 %s24, %s31
      %p65 = scmp.eq.s32.totalorder %s64, 0
      %s67 = sadd.s32 %s66, 1
      %s68 = scalar_select %p65, %s66, %s67
      %p71 = pneg %p65
      %p72 = scmp.eq.s32.totalorder %s16, 7
      %p73 = por %p71, %p72
      %p74 = scmp.ne.s32.totalorder %s66, %s69
      %p75 = scmp.eq.s32.totalorder %s16, 0
      %p76 = por %p74, %p75
      %p77 = scmp.ne.s32.totalorder %s66, %s69
      %p78 = scmp.eq.s32.totalorder %s21, 7
      %p79 = por %p77, %p78
      %p80 = scmp.ne.s32.totalorder %s69, %s70
      %p81 = scmp.eq.s32.totalorder %s21, 0
      %p82 = por %p80, %p81
      %p83 = scmp.ne.s32.totalorder %s69, %s70
      %p84 = scmp.eq.s32.totalorder %s22, 7
      %p85 = por %p83, %p84
      %p87 = scmp.ne.s32.totalorder %s70, %s86
      %p88 = scmp.eq.s32.totalorder %s22, 0
      %p89 = por %p87, %p88
      %s91 = sadd.s32 %s90, 1
      %p94 = scmp.eq.s32.totalorder %s16, 7
      %p95 = scmp.ne.s32.totalorder %s90, %s92
      %p96 = scmp.eq.s32.totalorder %s16, 0
      %p97 = por %p95, %p96
      %p98 = scmp.ne.s32.totalorder %s90, %s92
      %p99 = scmp.eq.s32.totalorder %s21, 7
      %p100 = por %p98, %p99
      %p101 = scmp.ne.s32.totalorder %s92, %s93
      %p102 = scmp.eq.s32.totalorder %s21, 0
      %p103 = por %p101, %p102
      %p104 = scmp.ne.s32.totalorder %s92, %s93
      %p105 = scmp.eq.s32.totalorder %s22, 7
      %p106 = por %p104, %p105
      %p108 = scmp.ne.s32.totalorder %s93, %s107
      %p109 = scmp.eq.s32.totalorder %s22, 0
      %p110 = por %p108, %p109
      %s112 = sadd.s32 %s111, 1
      %p115 = scmp.eq.s32.totalorder %s16, 7
      %p116 = scmp.ne.s32.totalorder %s111, %s113
      %p117 = scmp.eq.s32.totalorder %s16, 0
      %p118 = por %p116, %p117
      %p119 = scmp.ne.s32.totalorder %s111, %s113
      %p120 = scmp.eq.s32.totalorder %s21, 7
      %p121 = por %p119, %p120
      %p122 = scmp.ne.s32.totalorder %s113, %s114
      %p123 = scmp.eq.s32.totalorder %s21, 0
      %p124 = por %p122, %p123
      %p125 = scmp.ne.s32.totalorder %s113, %s114
      %p126 = scmp.eq.s32.totalorder %s22, 7
      %p127 = por %p125, %p126
      %p129 = scmp.ne.s32.totalorder %s114, %s128
      %p130 = scmp.eq.s32.totalorder %s22, 0
      %p131 = por %p129, %p130
      %s133 = sadd.s32 %s132, 1
      %p136 = scmp.eq.s32.totalorder %s16, 7
      %p137 = scmp.ne.s32.totalorder %s132, %s134
      %p138 = scmp.eq.s32.totalorder %s16, 0
      %p139 = por %p137, %p138
      %p140 = scmp.ne.s32.totalorder %s132, %s134
      %p141 = scmp.eq.s32.totalorder %s21, 7
      %p142 = por %p140, %p141
      %p143 = scmp.ne.s32.totalorder %s134, %s135
      %p144 = scmp.eq.s32.totalorder %s21, 0
      %p145 = por %p143, %p144
      %p146 = scmp.ne.s32.totalorder %s134, %s135
      %p147 = scmp.eq.s32.totalorder %s22, 7
      %p148 = por %p146, %p147
      %p150 = scmp.ne.s32.totalorder %s135, %s149
      %p151 = scmp.eq.s32.totalorder %s22, 0
      %p152 = por %p150, %p151
      %s153 = ssub.s32 %s23, %s35
      %p154 = scmp.eq.s32.totalorder %s153, 0
      %s156 = sadd.s32 %s155, 1
      %s157 = scalar_select %p154, %s155, %s156
      %p160 = pneg %p154
      %p161 = scmp.eq.s32.totalorder %s16, 7
      %p162 = por %p160, %p161
      %p163 = scmp.ne.s32.totalorder %s155, %s158
      %p164 = scmp.eq.s32.totalorder %s16, 0
      %p165 = por %p163, %p164
      %p166 = scmp.ne.s32.totalorder %s155, %s158
      %p167 = scmp.eq.s32.totalorder %s21, 7
      %p168 = por %p166, %p167
      %p169 = scmp.ne.s32.totalorder %s158, %s159
      %p170 = scmp.eq.s32.totalorder %s21, 0
      %p171 = por %p169, %p170
      %p172 = scmp.ne.s32.totalorder %s158, %s159
      %p173 = scmp.eq.s32.totalorder %s22, 7
      %p174 = por %p172, %p173
      %p176 = scmp.ne.s32.totalorder %s159, %s175
      %p177 = scmp.eq.s32.totalorder %s22, 0
      %p178 = por %p176, %p177
      %p179 = scmp.le.s32.totalorder 1, %s16
      %p180 = scmp.lt.s32.totalorder %s16, 9
      %p181 = pnand %p179, %p180
      %p182 = pneg %p181
      // Predicated region
      $region9: #{critic_forward_pallas.1} parent=5 // pred_check
        _
      $region10: #{critic_forward_pallas.1} parent=5 // pred_check_branch
        %184 = sbr.rel (%p181) target = $region12
      $region11: #{critic_forward_pallas.1} parent=5 // pred_region
        %s185 = ssub.s32 %s16, 1
        // Predicated region
        $region13: #{critic_forward_pallas.1} parent=11 // pred_check
          %p186 = pneg %p103
        $region14: #{critic_forward_pallas.1} parent=11 // pred_check_branch
          %188 = sbr.rel (%p186) target = $region16
        $region15: #{critic_forward_pallas.1} parent=11 // pred_region
          %s190 = ssub.s32 64, 64
          %191 = vsyncadd [#allocation6], %s190
          %s193 = sshll.u32 [#allocation5], 4
          %s194 = int_to_ptr.vmem [resolvable:$true] %s193
          %196 = dma.hbm_to_vmem [thread:$0]  %s2, 64, %s194, [#allocation6]
        $region16: #{critic_forward_pallas.1} parent=11 // pred_fallthru
          _
        // Predicated region
        $region17: #{critic_forward_pallas.1} parent=11 // pred_check
          %p197 = pneg %p124
        $region18: #{critic_forward_pallas.1} parent=11 // pred_check_branch
          %199 = sbr.rel (%p197) target = $region20
        $region19: #{critic_forward_pallas.1} parent=11 // pred_region
          %s201 = ssub.s32 4096, 4096
          %202 = vsyncadd [#allocation6], %s201
          %s203 = sshll.u32 [#allocation7], 4
          %s204 = int_to_ptr.vmem [resolvable:$true] %s203
          %209 = dma.hbm_to_vmem [thread:$0]  %s3, 4096, %s204, [#allocation6], 64, 64, 4
        $region20: #{critic_forward_pallas.1} parent=11 // pred_fallthru
          _
        // Predicated region
        $region21: #{critic_forward_pallas.1} parent=11 // pred_check
          %p210 = pneg %p145
        $region22: #{critic_forward_pallas.1} parent=11 // pred_check_branch
          %212 = sbr.rel (%p210) target = $region24
        $region23: #{critic_forward_pallas.1} parent=11 // pred_region
          %s214 = ssub.s32 16, 16
          %215 = vsyncadd [#allocation9], %s214
          %s217 = sshll.u32 [#allocation8], 4
          %s218 = int_to_ptr.vmem [resolvable:$true] %s217
          %220 = dma.hbm_to_vmem [thread:$0]  %s4, 16, %s218, [#allocation9]
        $region24: #{critic_forward_pallas.1} parent=11 // pred_fallthru
          _
      $region12: #{critic_forward_pallas.1} parent=5 // pred_fallthru
        _
      %p221 = scmp.lt.s32.totalorder %s16, 8
      // Predicated region
      $region25: #{critic_forward_pallas.1} parent=5 // pred_check
        %p222 = pneg %p221
      $region26: #{critic_forward_pallas.1} parent=5 // pred_check_branch
        %224 = sbr.rel (%p222) target = $region28
      $region27: #{critic_forward_pallas.1} parent=5 // pred_region
        // Predicated region
        $region29: #{critic_forward_pallas.1} parent=27 // pred_check
          %p225 = pneg %p50
        $region30: #{critic_forward_pallas.1} parent=27 // pred_check_branch
          %227 = sbr.rel (%p225) target = $region32
        $region31: #{critic_forward_pallas.1} parent=27 // pred_region
          %s228 = smul.u32 9, %s24
          %p229 = scmp.lt.s32.totalorder %s23, 0
          %s230 = scalar_select %p229, %s23, 0
          %p231 = scmp.lt.s32.totalorder %s228, 71
          %s232 = scalar_select %p231, %s228, 71
          %s233 = smul.addr %s230, 72
          %s234 = sadd.s32 %s232, %s233
          %s235 = smul.addr %s234, 2
          %s236 = scalar_lea.vmem %s0, %s235
          %s237 = smul.u32 9, %s24
        $region32: #{critic_forward_pallas.1} parent=27 // pred_fallthru
          _
        // Predicated region
        $region33: #{critic_forward_pallas.1} parent=27 // pred_check
          %p238 = pneg %p76
        $region34: #{critic_forward_pallas.1} parent=27 // pred_check_branch
          %240 = sbr.rel (%p238) target = $region36
        $region35: #{critic_forward_pallas.1} parent=27 // pred_region
          %s241 = sand.u32 %s66, 1
          %s242 = scalar_lea.sflag [#allocation4], %s241
          %s243 = sand.u32 %s66, 1
          %s244 = smul.addr %s243, 2304
          %s245 = scalar_lea.vmem [#allocation3], %s244
          %s246 = smul.u32 144, %s24
          %s248 = ssub.s32 36864, 36864
          %249 = vsyncadd %s242, %s248
          %s250 = smul.addr %s246, 4
          %s251 = smul.addr %s250, 64
          %s252 = scalar_lea.hbm %s1, %s251
          %s253 = sshll.u32 %s245, 4
          %s254 = int_to_ptr.vmem [resolvable:$true] %s253
          %259 = dma.hbm_to_vmem [thread:$0]  %s252, 36864, %s254, %s242, 256, 256, 16
        $region36: #{critic_forward_pallas.1} parent=27 // pred_fallthru
          _
      $region28: #{critic_forward_pallas.1} parent=5 // pred_fallthru
        _
      %p260 = scmp.le.s32.totalorder 1, %s16
      %p261 = scmp.lt.s32.totalorder %s16, 9
      %p262 = pnand %p260, %p261
      %p263 = pneg %p262
      // Predicated region
      $region37: #{critic_forward_pallas.1} parent=5 // pred_check
        _
      $region38: #{critic_forward_pallas.1} parent=5 // pred_check_branch
        %265 = sbr.rel (%p262) target = $region40
      $region39: #{critic_forward_pallas.1} parent=5 // pred_region
        %s266 = ssub.s32 %s16, 1
        %s267 = sand.u32 %s69, 1
        %s268 = scalar_lea.sflag [#allocation4], %s267
        %s269 = sand.u32 %s69, 1
        %s270 = smul.addr %s269, 2304
        %s271 = scalar_lea.vmem [#allocation3], %s270
        // Predicated region
        $region41: #{critic_forward_pallas.1} parent=39 // pred_check
          %p272 = pneg %p82
        $region42: #{critic_forward_pallas.1} parent=39 // pred_check_branch
          %274 = sbr.rel (%p272) target = $region44
        $region43: #{critic_forward_pallas.1} parent=39 // pred_region
          %275 = dma.done %s268, 36864
        $region44: #{critic_forward_pallas.1} parent=39 // pred_fallthru
          _
        // Predicated region
        $region45: #{critic_forward_pallas.1} parent=39 // pred_check
          %p276 = pneg %p103
        $region46: #{critic_forward_pallas.1} parent=39 // pred_check_branch
          %278 = sbr.rel (%p276) target = $region48
        $region47: #{critic_forward_pallas.1} parent=39 // pred_region
          %279 = dma.done [#allocation6], 64
        $region48: #{critic_forward_pallas.1} parent=39 // pred_fallthru
          _
        // Predicated region
        $region49: #{critic_forward_pallas.1} parent=39 // pred_check
          %p280 = pneg %p124
        $region50: #{critic_forward_pallas.1} parent=39 // pred_check_branch
          %282 = sbr.rel (%p280) target = $region52
        $region51: #{critic_forward_pallas.1} parent=39 // pred_region
          %283 = dma.done [#allocation6], 4096
        $region52: #{critic_forward_pallas.1} parent=39 // pred_fallthru
          _
        // Predicated region
        $region53: #{critic_forward_pallas.1} parent=39 // pred_check
          %p284 = pneg %p145
        $region54: #{critic_forward_pallas.1} parent=39 // pred_check_branch
          %286 = sbr.rel (%p284) target = $region56
        $region55: #{critic_forward_pallas.1} parent=39 // pred_region
          %287 = dma.done [#allocation9], 16
        $region56: #{critic_forward_pallas.1} parent=39 // pred_fallthru
          _
        %s288 = smul.u32 9, %s26
        %p289 = scmp.lt.s32.totalorder %s25, 0
        %s290 = scalar_select %p289, %s25, 0
        %p291 = scmp.lt.s32.totalorder %s288, 71
        %s292 = scalar_select %p291, %s288, 71
        %s293 = smul.addr %s290, 72
        %s294 = sadd.s32 %s292, %s293
        %s295 = smul.addr %s294, 2
        %s296 = scalar_lea.vmem %s0, %s295
        %p297 = pneg %p56
        %p298 = pneg %p53
        %s299 = sand.u32 %s69, 1
        %s300 = scalar_lea.sflag [#allocation4], %s299
        %s301 = sand.u32 %s69, 1
        %s302 = smul.addr %s301, 2304
        %s303 = scalar_lea.vmem [#allocation3], %s302
        %p304 = pneg %p82
        %p305 = pneg %p79
        %p306 = pneg %p103
        %p307 = pneg %p100
        %p308 = pneg %p124
        %p309 = pneg %p121
        %p310 = pneg %p145
        %p311 = pneg %p142
        %p312 = pneg %p171
        %p313 = pneg %p168
        %p314 = scmp.lt.s32.totalorder %s25, 0
        %s315 = scalar_select %p314, %s25, 0
        %s316 = smul.addr %s315, 4
        %s317 = scalar_lea.vmem %s5, %s316
        %s318 = smul.u32 9, %s26
        %p319 = scmp.lt.s32.totalorder %s25, 0
        %s320 = scalar_select %p319, %s25, 0
        %p321 = scmp.lt.s32.totalorder %s318, 71
        %s322 = scalar_select %p321, %s318, 71
        %s323 = smul.addr %s320, 72
        %s324 = sadd.s32 %s322, %s323
        %s325 = smul.addr %s324, 2
        %s326 = scalar_lea.vmem %s0, %s325
        %s327 = smul.u32 9, %s26
        %s328 = smul.u32 144, %s26
        %p329 = scmp.lt.s32.totalorder %s25, 0
        %s330 = scalar_select %p329, %s25, 0
        %s331 = smul.addr %s330, 4
        %s332 = scalar_lea.vmem %s5, %s331
        %p334 = scmp.eq.s32.totalorder %s26, 0
        // Predicated region
        $region57: #{critic_forward_pallas.1} parent=39 // pred_check
          %p335 = pneg %p334
        $region58: #{critic_forward_pallas.1} parent=39 // pred_check_branch
          %337 = sbr.rel (%p335) target = $region60
        $region59: #{critic_forward_pallas.1} parent=39 // pred_region
          %338 = vst [vmem:[#allocation2] sm:$0xff] 0.0
          %339 = vst [vmem:[#allocation2 + $0x8] sm:$0xff] 0.0
        $region60: #{critic_forward_pallas.1} parent=39 // pred_fallthru
          _
        %v340 = vld [vmem:[#allocation2] sm:$0xff]
        %v341 = vld [vmem:[#allocation2 + $0x8] sm:$0xff]
        %v342 = vld [vmem:[%s326] sm:$0xff]
        %v343 = vld [vmem:[%s326 + $0x8] sm:$0xff]
        %v344 = vld [vmem:[%s326 + $0x10] sm:$0x3]
        %v345 = vld [vmem:[%s271] sm:$0xff]
        %v346 = vld [vmem:[%s271 + $0x8] sm:$0xff]
        %v347 = vld [vmem:[%s271 + $0x10] sm:$0xff]
        %v348 = vld [vmem:[%s271 + $0x18] sm:$0xff]
        %v349 = vld [vmem:[%s271 + $0x20] sm:$0xff]
        %v350 = vld [vmem:[%s271 + $0x28] sm:$0xff]
        %v351 = vld [vmem:[%s271 + $0x30] sm:$0xff]
        %v352 = vld [vmem:[%s271 + $0x38] sm:$0xff]
        %v353 = vld [vmem:[%s271 + $0x40] sm:$0xff]
        %v354 = vld [vmem:[%s271 + $0x48] sm:$0xff]
        %v355 = vld [vmem:[%s271 + $0x50] sm:$0xff]
        %v356 = vld [vmem:[%s271 + $0x58] sm:$0xff]
        %v357 = vld [vmem:[%s271 + $0x60] sm:$0xff]
        %v358 = vld [vmem:[%s271 + $0x68] sm:$0xff]
        %v359 = vld [vmem:[%s271 + $0x70] sm:$0xff]
        %v360 = vld [vmem:[%s271 + $0x78] sm:$0xff]
        %v361 = vld [vmem:[%s271 + $0x80] sm:$0xff]
        %v362 = vld [vmem:[%s271 + $0x88] sm:$0xff]
        %v363 = vld [vmem:[%s271 + $0x90] sm:$0xff]
        %v364 = vld [vmem:[%s271 + $0x98] sm:$0xff]
        %v365 = vld [vmem:[%s271 + $0xa0] sm:$0xff]
        %v366 = vld [vmem:[%s271 + $0xa8] sm:$0xff]
        %v367 = vld [vmem:[%s271 + $0xb0] sm:$0xff]
        %v368 = vld [vmem:[%s271 + $0xb8] sm:$0xff]
        %v369 = vld [vmem:[%s271 + $0xc0] sm:$0xff]
        %v370 = vld [vmem:[%s271 + $0xc8] sm:$0xff]
        %v371 = vld [vmem:[%s271 + $0xd0] sm:$0xff]
        %v372 = vld [vmem:[%s271 + $0xd8] sm:$0xff]
        %v373 = vld [vmem:[%s271 + $0xe0] sm:$0xff]
        %v374 = vld [vmem:[%s271 + $0xe8] sm:$0xff]
        %v375 = vld [vmem:[%s271 + $0xf0] sm:$0xff]
        %v376 = vld [vmem:[%s271 + $0xf8] sm:$0xff]
        %v377 = vld [vmem:[%s271 + $0x100] sm:$0xff]
        %v378 = vld [vmem:[%s271 + $0x108] sm:$0xff]
        %v379 = vld [vmem:[%s271 + $0x110] sm:$0xff]
        %v380 = vld [vmem:[%s271 + $0x118] sm:$0xff]
        %v381 = vld [vmem:[%s271 + $0x120] sm:$0xff]
        %v382 = vld [vmem:[%s271 + $0x128] sm:$0xff]
        %v383 = vld [vmem:[%s271 + $0x130] sm:$0xff]
        %v384 = vld [vmem:[%s271 + $0x138] sm:$0xff]
        %v385 = vld [vmem:[%s271 + $0x140] sm:$0xff]
        %v386 = vld [vmem:[%s271 + $0x148] sm:$0xff]
        %v387 = vld [vmem:[%s271 + $0x150] sm:$0xff]
        %v388 = vld [vmem:[%s271 + $0x158] sm:$0xff]
        %v389 = vld [vmem:[%s271 + $0x160] sm:$0xff]
        %v390 = vld [vmem:[%s271 + $0x168] sm:$0xff]
        %v391 = vld [vmem:[%s271 + $0x170] sm:$0xff]
        %v392 = vld [vmem:[%s271 + $0x178] sm:$0xff]
        %v393 = vld [vmem:[%s271 + $0x180] sm:$0xff]
        %v394 = vld [vmem:[%s271 + $0x188] sm:$0xff]
        %v395 = vld [vmem:[%s271 + $0x190] sm:$0xff]
        %v396 = vld [vmem:[%s271 + $0x198] sm:$0xff]
        %v397 = vld [vmem:[%s271 + $0x1a0] sm:$0xff]
        %v398 = vld [vmem:[%s271 + $0x1a8] sm:$0xff]
        %v399 = vld [vmem:[%s271 + $0x1b0] sm:$0xff]
        %v400 = vld [vmem:[%s271 + $0x1b8] sm:$0xff]
        %v401 = vld [vmem:[%s271 + $0x1c0] sm:$0xff]
        %v402 = vld [vmem:[%s271 + $0x1c8] sm:$0xff]
        %v403 = vld [vmem:[%s271 + $0x1d0] sm:$0xff]
        %v404 = vld [vmem:[%s271 + $0x1d8] sm:$0xff]
        %v405 = vld [vmem:[%s271 + $0x1e0] sm:$0xff]
        %v406 = vld [vmem:[%s271 + $0x1e8] sm:$0xff]
        %v407 = vld [vmem:[%s271 + $0x1f0] sm:$0xff]
        %v408 = vld [vmem:[%s271 + $0x1f8] sm:$0xff]
        %v409 = vld [vmem:[%s271 + $0x200] sm:$0xff]
        %v410 = vld [vmem:[%s271 + $0x208] sm:$0xff]
        %v411 = vld [vmem:[%s271 + $0x210] sm:$0xff]
        %v412 = vld [vmem:[%s271 + $0x218] sm:$0xff]
        %v413 = vld [vmem:[%s271 + $0x220] sm:$0xff]
        %v414 = vld [vmem:[%s271 + $0x228] sm:$0xff]
        %v415 = vld [vmem:[%s271 + $0x230] sm:$0xff]
        %v416 = vld [vmem:[%s271 + $0x238] sm:$0xff]
        %v417 = vld [vmem:[%s271 + $0x240] sm:$0xff]
        %v418 = vld [vmem:[%s271 + $0x248] sm:$0xff]
        %v419 = vld [vmem:[%s271 + $0x250] sm:$0xff]
        %v420 = vld [vmem:[%s271 + $0x258] sm:$0xff]
        %v421 = vld [vmem:[%s271 + $0x260] sm:$0xff]
        %v422 = vld [vmem:[%s271 + $0x268] sm:$0xff]
        %v423 = vld [vmem:[%s271 + $0x270] sm:$0xff]
        %v424 = vld [vmem:[%s271 + $0x278] sm:$0xff]
        %v425 = vld [vmem:[%s271 + $0x280] sm:$0xff]
        %v426 = vld [vmem:[%s271 + $0x288] sm:$0xff]
        %v427 = vld [vmem:[%s271 + $0x290] sm:$0xff]
        %v428 = vld [vmem:[%s271 + $0x298] sm:$0xff]
        %v429 = vld [vmem:[%s271 + $0x2a0] sm:$0xff]
        %v430 = vld [vmem:[%s271 + $0x2a8] sm:$0xff]
        %v431 = vld [vmem:[%s271 + $0x2b0] sm:$0xff]
        %v432 = vld [vmem:[%s271 + $0x2b8] sm:$0xff]
        %v433 = vld [vmem:[%s271 + $0x2c0] sm:$0xff]
        %v434 = vld [vmem:[%s271 + $0x2c8] sm:$0xff]
        %v435 = vld [vmem:[%s271 + $0x2d0] sm:$0xff]
        %v436 = vld [vmem:[%s271 + $0x2d8] sm:$0xff]
        %v437 = vld [vmem:[%s271 + $0x2e0] sm:$0xff]
        %v438 = vld [vmem:[%s271 + $0x2e8] sm:$0xff]
        %v439 = vld [vmem:[%s271 + $0x2f0] sm:$0xff]
        %v440 = vld [vmem:[%s271 + $0x2f8] sm:$0xff]
        %v441 = vld [vmem:[%s271 + $0x300] sm:$0xff]
        %v442 = vld [vmem:[%s271 + $0x308] sm:$0xff]
        %v443 = vld [vmem:[%s271 + $0x310] sm:$0xff]
        %v444 = vld [vmem:[%s271 + $0x318] sm:$0xff]
        %v445 = vld [vmem:[%s271 + $0x320] sm:$0xff]
        %v446 = vld [vmem:[%s271 + $0x328] sm:$0xff]
        %v447 = vld [vmem:[%s271 + $0x330] sm:$0xff]
        %v448 = vld [vmem:[%s271 + $0x338] sm:$0xff]
        %v449 = vld [vmem:[%s271 + $0x340] sm:$0xff]
        %v450 = vld [vmem:[%s271 + $0x348] sm:$0xff]
        %v451 = vld [vmem:[%s271 + $0x350] sm:$0xff]
        %v452 = vld [vmem:[%s271 + $0x358] sm:$0xff]
        %v453 = vld [vmem:[%s271 + $0x360] sm:$0xff]
        %v454 = vld [vmem:[%s271 + $0x368] sm:$0xff]
        %v455 = vld [vmem:[%s271 + $0x370] sm:$0xff]
        %v456 = vld [vmem:[%s271 + $0x378] sm:$0xff]
        %v457 = vld [vmem:[%s271 + $0x380] sm:$0xff]
        %v458 = vld [vmem:[%s271 + $0x388] sm:$0xff]
        %v459 = vld [vmem:[%s271 + $0x390] sm:$0xff]
        %v460 = vld [vmem:[%s271 + $0x398] sm:$0xff]
        %v461 = vld [vmem:[%s271 + $0x3a0] sm:$0xff]
        %v462 = vld [vmem:[%s271 + $0x3a8] sm:$0xff]
        %v463 = vld [vmem:[%s271 + $0x3b0] sm:$0xff]
        %v464 = vld [vmem:[%s271 + $0x3b8] sm:$0xff]
        %v465 = vld [vmem:[%s271 + $0x3c0] sm:$0xff]
        %v466 = vld [vmem:[%s271 + $0x3c8] sm:$0xff]
        %v467 = vld [vmem:[%s271 + $0x3d0] sm:$0xff]
        %v468 = vld [vmem:[%s271 + $0x3d8] sm:$0xff]
        %v469 = vld [vmem:[%s271 + $0x3e0] sm:$0xff]
        %v470 = vld [vmem:[%s271 + $0x3e8] sm:$0xff]
        %v471 = vld [vmem:[%s271 + $0x3f0] sm:$0xff]
        %v472 = vld [vmem:[%s271 + $0x3f8] sm:$0xff]
        %v473 = vld [vmem:[%s271 + $0x400] sm:$0xff]
        %v474 = vld [vmem:[%s271 + $0x408] sm:$0xff]
        %v475 = vld [vmem:[%s271 + $0x410] sm:$0xff]
        %v476 = vld [vmem:[%s271 + $0x418] sm:$0xff]
        %v477 = vld [vmem:[%s271 + $0x420] sm:$0xff]
        %v478 = vld [vmem:[%s271 + $0x428] sm:$0xff]
        %v479 = vld [vmem:[%s271 + $0x430] sm:$0xff]
        %v480 = vld [vmem:[%s271 + $0x438] sm:$0xff]
        %v481 = vld [vmem:[%s271 + $0x440] sm:$0xff]
        %v482 = vld [vmem:[%s271 + $0x448] sm:$0xff]
        %v483 = vld [vmem:[%s271 + $0x450] sm:$0xff]
        %v484 = vld [vmem:[%s271 + $0x458] sm:$0xff]
        %v485 = vld [vmem:[%s271 + $0x460] sm:$0xff]
        %v486 = vld [vmem:[%s271 + $0x468] sm:$0xff]
        %v487 = vld [vmem:[%s271 + $0x470] sm:$0xff]
        %v488 = vld [vmem:[%s271 + $0x478] sm:$0xff]
        %v489 = vld [vmem:[%s271 + $0x480] sm:$0xff]
        %v490 = vld [vmem:[%s271 + $0x488] sm:$0xff]
        %v491 = vld [vmem:[%s271 + $0x490] sm:$0xff]
        %v492 = vld [vmem:[%s271 + $0x498] sm:$0xff]
        %v493 = vld [vmem:[%s271 + $0x4a0] sm:$0xff]
        %v494 = vld [vmem:[%s271 + $0x4a8] sm:$0xff]
        %v495 = vld [vmem:[%s271 + $0x4b0] sm:$0xff]
        %v496 = vld [vmem:[%s271 + $0x4b8] sm:$0xff]
        %v497 = vld [vmem:[%s271 + $0x4c0] sm:$0xff]
        %v498 = vld [vmem:[%s271 + $0x4c8] sm:$0xff]
        %v499 = vld [vmem:[%s271 + $0x4d0] sm:$0xff]
        %v500 = vld [vmem:[%s271 + $0x4d8] sm:$0xff]
        %v501 = vld [vmem:[%s271 + $0x4e0] sm:$0xff]
        %v502 = vld [vmem:[%s271 + $0x4e8] sm:$0xff]
        %v503 = vld [vmem:[%s271 + $0x4f0] sm:$0xff]
        %v504 = vld [vmem:[%s271 + $0x4f8] sm:$0xff]
        %v505 = vld [vmem:[%s271 + $0x500] sm:$0xff]
        %v506 = vld [vmem:[%s271 + $0x508] sm:$0xff]
        %v507 = vld [vmem:[%s271 + $0x510] sm:$0xff]
        %v508 = vld [vmem:[%s271 + $0x518] sm:$0xff]
        %v509 = vld [vmem:[%s271 + $0x520] sm:$0xff]
        %v510 = vld [vmem:[%s271 + $0x528] sm:$0xff]
        %v511 = vld [vmem:[%s271 + $0x530] sm:$0xff]
        %v512 = vld [vmem:[%s271 + $0x538] sm:$0xff]
        %v513 = vld [vmem:[%s271 + $0x540] sm:$0xff]
        %v514 = vld [vmem:[%s271 + $0x548] sm:$0xff]
        %v515 = vld [vmem:[%s271 + $0x550] sm:$0xff]
        %v516 = vld [vmem:[%s271 + $0x558] sm:$0xff]
        %v517 = vld [vmem:[%s271 + $0x560] sm:$0xff]
        %v518 = vld [vmem:[%s271 + $0x568] sm:$0xff]
        %v519 = vld [vmem:[%s271 + $0x570] sm:$0xff]
        %v520 = vld [vmem:[%s271 + $0x578] sm:$0xff]
        %v521 = vld [vmem:[%s271 + $0x580] sm:$0xff]
        %v522 = vld [vmem:[%s271 + $0x588] sm:$0xff]
        %v523 = vld [vmem:[%s271 + $0x590] sm:$0xff]
        %v524 = vld [vmem:[%s271 + $0x598] sm:$0xff]
        %v525 = vld [vmem:[%s271 + $0x5a0] sm:$0xff]
        %v526 = vld [vmem:[%s271 + $0x5a8] sm:$0xff]
        %v527 = vld [vmem:[%s271 + $0x5b0] sm:$0xff]
        %v528 = vld [vmem:[%s271 + $0x5b8] sm:$0xff]
        %v529 = vld [vmem:[%s271 + $0x5c0] sm:$0xff]
        %v530 = vld [vmem:[%s271 + $0x5c8] sm:$0xff]
        %v531 = vld [vmem:[%s271 + $0x5d0] sm:$0xff]
        %v532 = vld [vmem:[%s271 + $0x5d8] sm:$0xff]
        %v533 = vld [vmem:[%s271 + $0x5e0] sm:$0xff]
        %v534 = vld [vmem:[%s271 + $0x5e8] sm:$0xff]
        %v535 = vld [vmem:[%s271 + $0x5f0] sm:$0xff]
        %v536 = vld [vmem:[%s271 + $0x5f8] sm:$0xff]
        %v537 = vld [vmem:[%s271 + $0x600] sm:$0xff]
        %v538 = vld [vmem:[%s271 + $0x608] sm:$0xff]
        %v539 = vld [vmem:[%s271 + $0x610] sm:$0xff]
        %v540 = vld [vmem:[%s271 + $0x618] sm:$0xff]
        %v541 = vld [vmem:[%s271 + $0x620] sm:$0xff]
        %v542 = vld [vmem:[%s271 + $0x628] sm:$0xff]
        %v543 = vld [vmem:[%s271 + $0x630] sm:$0xff]
        %v544 = vld [vmem:[%s271 + $0x638] sm:$0xff]
        %v545 = vld [vmem:[%s271 + $0x640] sm:$0xff]
        %v546 = vld [vmem:[%s271 + $0x648] sm:$0xff]
        %v547 = vld [vmem:[%s271 + $0x650] sm:$0xff]
        %v548 = vld [vmem:[%s271 + $0x658] sm:$0xff]
        %v549 = vld [vmem:[%s271 + $0x660] sm:$0xff]
        %v550 = vld [vmem:[%s271 + $0x668] sm:$0xff]
        %v551 = vld [vmem:[%s271 + $0x670] sm:$0xff]
        %v552 = vld [vmem:[%s271 + $0x678] sm:$0xff]
        %v553 = vld [vmem:[%s271 + $0x680] sm:$0xff]
        %v554 = vld [vmem:[%s271 + $0x688] sm:$0xff]
        %v555 = vld [vmem:[%s271 + $0x690] sm:$0xff]
        %v556 = vld [vmem:[%s271 + $0x698] sm:$0xff]
        %v557 = vld [vmem:[%s271 + $0x6a0] sm:$0xff]
        %v558 = vld [vmem:[%s271 + $0x6a8] sm:$0xff]
        %v559 = vld [vmem:[%s271 + $0x6b0] sm:$0xff]
        %v560 = vld [vmem:[%s271 + $0x6b8] sm:$0xff]
        %v561 = vld [vmem:[%s271 + $0x6c0] sm:$0xff]
        %v562 = vld [vmem:[%s271 + $0x6c8] sm:$0xff]
        %v563 = vld [vmem:[%s271 + $0x6d0] sm:$0xff]
        %v564 = vld [vmem:[%s271 + $0x6d8] sm:$0xff]
        %v565 = vld [vmem:[%s271 + $0x6e0] sm:$0xff]
        %v566 = vld [vmem:[%s271 + $0x6e8] sm:$0xff]
        %v567 = vld [vmem:[%s271 + $0x6f0] sm:$0xff]
        %v568 = vld [vmem:[%s271 + $0x6f8] sm:$0xff]
        %v569 = vld [vmem:[%s271 + $0x700] sm:$0xff]
        %v570 = vld [vmem:[%s271 + $0x708] sm:$0xff]
        %v571 = vld [vmem:[%s271 + $0x710] sm:$0xff]
        %v572 = vld [vmem:[%s271 + $0x718] sm:$0xff]
        %v573 = vld [vmem:[%s271 + $0x720] sm:$0xff]
        %v574 = vld [vmem:[%s271 + $0x728] sm:$0xff]
        %v575 = vld [vmem:[%s271 + $0x730] sm:$0xff]
        %v576 = vld [vmem:[%s271 + $0x738] sm:$0xff]
        %v577 = vld [vmem:[%s271 + $0x740] sm:$0xff]
        %v578 = vld [vmem:[%s271 + $0x748] sm:$0xff]
        %v579 = vld [vmem:[%s271 + $0x750] sm:$0xff]
        %v580 = vld [vmem:[%s271 + $0x758] sm:$0xff]
        %v581 = vld [vmem:[%s271 + $0x760] sm:$0xff]
        %v582 = vld [vmem:[%s271 + $0x768] sm:$0xff]
        %v583 = vld [vmem:[%s271 + $0x770] sm:$0xff]
        %v584 = vld [vmem:[%s271 + $0x778] sm:$0xff]
        %v585 = vld [vmem:[%s271 + $0x780] sm:$0xff]
        %v586 = vld [vmem:[%s271 + $0x788] sm:$0xff]
        %v587 = vld [vmem:[%s271 + $0x790] sm:$0xff]
        %v588 = vld [vmem:[%s271 + $0x798] sm:$0xff]
        %v589 = vld [vmem:[%s271 + $0x7a0] sm:$0xff]
        %v590 = vld [vmem:[%s271 + $0x7a8] sm:$0xff]
        %v591 = vld [vmem:[%s271 + $0x7b0] sm:$0xff]
        %v592 = vld [vmem:[%s271 + $0x7b8] sm:$0xff]
        %v593 = vld [vmem:[%s271 + $0x7c0] sm:$0xff]
        %v594 = vld [vmem:[%s271 + $0x7c8] sm:$0xff]
        %v595 = vld [vmem:[%s271 + $0x7d0] sm:$0xff]
        %v596 = vld [vmem:[%s271 + $0x7d8] sm:$0xff]
        %v597 = vld [vmem:[%s271 + $0x7e0] sm:$0xff]
        %v598 = vld [vmem:[%s271 + $0x7e8] sm:$0xff]
        %v599 = vld [vmem:[%s271 + $0x7f0] sm:$0xff]
        %v600 = vld [vmem:[%s271 + $0x7f8] sm:$0xff]
        %v601 = vld [vmem:[%s271 + $0x800] sm:$0xff]
        %v602 = vld [vmem:[%s271 + $0x808] sm:$0xff]
        %v603 = vld [vmem:[%s271 + $0x810] sm:$0xff]
        %v604 = vld [vmem:[%s271 + $0x818] sm:$0xff]
        %v605 = vld [vmem:[%s271 + $0x820] sm:$0xff]
        %v606 = vld [vmem:[%s271 + $0x828] sm:$0xff]
        %v607 = vld [vmem:[%s271 + $0x830] sm:$0xff]
        %v608 = vld [vmem:[%s271 + $0x838] sm:$0xff]
        %v609 = vld [vmem:[%s271 + $0x840] sm:$0xff]
        %v610 = vld [vmem:[%s271 + $0x848] sm:$0xff]
        %v611 = vld [vmem:[%s271 + $0x850] sm:$0xff]
        %v612 = vld [vmem:[%s271 + $0x858] sm:$0xff]
        %v613 = vld [vmem:[%s271 + $0x860] sm:$0xff]
        %v614 = vld [vmem:[%s271 + $0x868] sm:$0xff]
        %v615 = vld [vmem:[%s271 + $0x870] sm:$0xff]
        %v616 = vld [vmem:[%s271 + $0x878] sm:$0xff]
        %v617 = vld [vmem:[%s271 + $0x880] sm:$0xff]
        %v618 = vld [vmem:[%s271 + $0x888] sm:$0xff]
        %v619 = vld [vmem:[%s271 + $0x890] sm:$0xff]
        %v620 = vld [vmem:[%s271 + $0x898] sm:$0xff]
        %v621 = vld [vmem:[%s271 + $0x8a0] sm:$0xff]
        %v622 = vld [vmem:[%s271 + $0x8a8] sm:$0xff]
        %v623 = vld [vmem:[%s271 + $0x8b0] sm:$0xff]
        %v624 = vld [vmem:[%s271 + $0x8b8] sm:$0xff]
        %v625 = vld [vmem:[%s271 + $0x8c0] sm:$0xff]
        %v626 = vld [vmem:[%s271 + $0x8c8] sm:$0xff]
        %v627 = vld [vmem:[%s271 + $0x8d0] sm:$0xff]
        %v628 = vld [vmem:[%s271 + $0x8d8] sm:$0xff]
        %v629 = vld [vmem:[%s271 + $0x8e0] sm:$0xff]
        %v630 = vld [vmem:[%s271 + $0x8e8] sm:$0xff]
        %v631 = vld [vmem:[%s271 + $0x8f0] sm:$0xff]
        %v632 = vld [vmem:[%s271 + $0x8f8] sm:$0xff]
        %v636 = vcombine.high %v342, %v342
        %v638 = vunpack.c.l.s4 1983009808
        %v639 = vunpack.c.0.s8 %v638
        %v640 = vlaneseq
        %v641 = vshrl.u32 %v640, 7
        %v642 = vsub.s32 %v639, %v641
        %v643 = vrot.slane %v342, %v642
        %v645 = vunpack.c.l.s4 1983009808
        %v646 = vunpack.c.0.s8 %v645
        %v647 = vlaneseq
        %v648 = vshrl.u32 %v647, 7
        %v649 = vsub.s32 %v646, %v648
        %v650 = vrot.slane %v636, %v649
        %v651 = vcombine.high %v643, %v643
        %v652 = vcombine.high %v650, %v650
        %v653 = vcombine.high %v343, %v343
        %v655 = vunpack.c.l.s4 1983009808
        %v656 = vunpack.c.0.s8 %v655
        %v657 = vlaneseq
        %v658 = vshrl.u32 %v657, 7
        %v659 = vsub.s32 %v656, %v658
        %v660 = vrot.slane %v343, %v659
        %v662 = vunpack.c.l.s4 1983009808
        %v663 = vunpack.c.0.s8 %v662
        %v664 = vlaneseq
        %v665 = vshrl.u32 %v664, 7
        %v666 = vsub.s32 %v663, %v665
        %v667 = vrot.slane %v653, %v666
        %v668 = vcombine.high %v660, %v660
        %v669 = vcombine.high %v667, %v667
        %v671 = vunpack.c.l.s4 1983009808
        %v672 = vunpack.c.0.s8 %v671
        %v673 = vlaneseq
        %v674 = vshrl.u32 %v673, 7
        %v675 = vsub.s32 %v672, %v674
        %v676 = vrot.slane %v344, %v675
        %v974 = vunpack.c.l.b16 %v345
        %v975 = vunpack.c.h.b16 %v345
        %v976 = vunpack.c.l.b16 %v346
        %v977 = vunpack.c.h.b16 %v346
        %v978 = vunpack.c.l.b16 %v347
        %v979 = vunpack.c.h.b16 %v347
        %v980 = vunpack.c.l.b16 %v348
        %v981 = vunpack.c.h.b16 %v348
        %v982 = vunpack.c.l.b16 %v349
        %v983 = vunpack.c.h.b16 %v349
        %v984 = vunpack.c.l.b16 %v350
        %v985 = vunpack.c.h.b16 %v350
        %v986 = vunpack.c.l.b16 %v351
        %v987 = vunpack.c.h.b16 %v351
        %v988 = vunpack.c.l.b16 %v352
        %v989 = vunpack.c.h.b16 %v352
        %v990 = vunpack.c.l.b16 %v353
        %v991 = vunpack.c.h.b16 %v353
        %v992 = vunpack.c.l.b16 %v354
        %v993 = vunpack.c.h.b16 %v354
        %v994 = vunpack.c.l.b16 %v355
        %v995 = vunpack.c.h.b16 %v355
        %v996 = vunpack.c.l.b16 %v356
        %v997 = vunpack.c.h.b16 %v356
        %v998 = vunpack.c.l.b16 %v357
        %v999 = vunpack.c.h.b16 %v357
        %v1000 = vunpack.c.l.b16 %v358
        %v1001 = vunpack.c.h.b16 %v358
        %v1002 = vunpack.c.l.b16 %v359
        %v1003 = vunpack.c.h.b16 %v359
        %v1004 = vunpack.c.l.b16 %v360
        %v1005 = vunpack.c.h.b16 %v360
        %v1006 = vunpack.c.l.b16 %v361
        %v1007 = vunpack.c.h.b16 %v361
        %v1008 = vunpack.c.l.b16 %v362
        %v1009 = vunpack.c.h.b16 %v362
        %v1010 = vunpack.c.l.b16 %v363
        %v1011 = vunpack.c.h.b16 %v363
        %v1012 = vunpack.c.l.b16 %v364
        %v1013 = vunpack.c.h.b16 %v364
        %v1014 = vunpack.c.l.b16 %v365
        %v1015 = vunpack.c.h.b16 %v365
        %v1016 = vunpack.c.l.b16 %v366
        %v1017 = vunpack.c.h.b16 %v366
        %v1018 = vunpack.c.l.b16 %v367
        %v1019 = vunpack.c.h.b16 %v367
        %v1020 = vunpack.c.l.b16 %v368
        %v1021 = vunpack.c.h.b16 %v368
        %v1022 = vunpack.c.l.b16 %v369
        %v1023 = vunpack.c.h.b16 %v369
        %v1024 = vunpack.c.l.b16 %v370
        %v1025 = vunpack.c.h.b16 %v370
        %v1026 = vunpack.c.l.b16 %v371
        %v1027 = vunpack.c.h.b16 %v371
        %v1028 = vunpack.c.l.b16 %v372
        %v1029 = vunpack.c.h.b16 %v372
        %v1030 = vunpack.c.l.b16 %v373
        %v1031 = vunpack.c.h.b16 %v373
        %v1032 = vunpack.c.l.b16 %v374
        %v1033 = vunpack.c.h.b16 %v374
        %v1034 = vunpack.c.l.b16 %v375
        %v1035 = vunpack.c.h.b16 %v375
        %v1036 = vunpack.c.l.b16 %v376
        %v1037 = vunpack.c.h.b16 %v376
        %v1038 = vunpack.c.l.b16 %v377
        %v1039 = vunpack.c.h.b16 %v377
        %v1040 = vunpack.c.l.b16 %v378
        %v1041 = vunpack.c.h.b16 %v378
        %v1042 = vunpack.c.l.b16 %v379
        %v1043 = vunpack.c.h.b16 %v379
        %v1044 = vunpack.c.l.b16 %v380
        %v1045 = vunpack.c.h.b16 %v380
        %v1046 = vunpack.c.l.b16 %v381
        %v1047 = vunpack.c.h.b16 %v381
        %v1048 = vunpack.c.l.b16 %v382
        %v1049 = vunpack.c.h.b16 %v382
        %v1050 = vunpack.c.l.b16 %v383
        %v1051 = vunpack.c.h.b16 %v383
        %v1052 = vunpack.c.l.b16 %v384
        %v1053 = vunpack.c.h.b16 %v384
        %v1054 = vunpack.c.l.b16 %v385
        %v1055 = vunpack.c.h.b16 %v385
        %v1056 = vunpack.c.l.b16 %v386
        %v1057 = vunpack.c.h.b16 %v386
        %v1058 = vunpack.c.l.b16 %v387
        %v1059 = vunpack.c.h.b16 %v387
        %v1060 = vunpack.c.l.b16 %v388
        %v1061 = vunpack.c.h.b16 %v388
        %v1062 = vunpack.c.l.b16 %v389
        %v1063 = vunpack.c.h.b16 %v389
        %v1064 = vunpack.c.l.b16 %v390
        %v1065 = vunpack.c.h.b16 %v390
        %v1066 = vunpack.c.l.b16 %v391
        %v1067 = vunpack.c.h.b16 %v391
        %v1068 = vunpack.c.l.b16 %v392
        %v1069 = vunpack.c.h.b16 %v392
        %v1070 = vunpack.c.l.b16 %v393
        %v1071 = vunpack.c.h.b16 %v393
        %v1072 = vunpack.c.l.b16 %v394
        %v1073 = vunpack.c.h.b16 %v394
        %v1074 = vunpack.c.l.b16 %v395
        %v1075 = vunpack.c.h.b16 %v395
        %v1076 = vunpack.c.l.b16 %v396
        %v1077 = vunpack.c.h.b16 %v396
        %v1078 = vunpack.c.l.b16 %v397
        %v1079 = vunpack.c.h.b16 %v397
        %v1080 = vunpack.c.l.b16 %v398
        %v1081 = vunpack.c.h.b16 %v398
        %v1082 = vunpack.c.l.b16 %v399
        %v1083 = vunpack.c.h.b16 %v399
        %v1084 = vunpack.c.l.b16 %v400
        %v1085 = vunpack.c.h.b16 %v400
        %v1086 = vunpack.c.l.b16 %v401
        %v1087 = vunpack.c.h.b16 %v401
        %v1088 = vunpack.c.l.b16 %v402
        %v1089 = vunpack.c.h.b16 %v402
        %v1090 = vunpack.c.l.b16 %v403
        %v1091 = vunpack.c.h.b16 %v403
        %v1092 = vunpack.c.l.b16 %v404
        %v1093 = vunpack.c.h.b16 %v404
        %v1094 = vunpack.c.l.b16 %v405
        %v1095 = vunpack.c.h.b16 %v405
        %v1096 = vunpack.c.l.b16 %v406
        %v1097 = vunpack.c.h.b16 %v406
        %v1098 = vunpack.c.l.b16 %v407
        %v1099 = vunpack.c.h.b16 %v407
        %v1100 = vunpack.c.l.b16 %v408
        %v1101 = vunpack.c.h.b16 %v408
        %v1102 = vunpack.c.l.b16 %v409
        %v1103 = vunpack.c.h.b16 %v409
        %v1104 = vunpack.c.l.b16 %v410
        %v1105 = vunpack.c.h.b16 %v410
        %v1106 = vunpack.c.l.b16 %v411
        %v1107 = vunpack.c.h.b16 %v411
        %v1108 = vunpack.c.l.b16 %v412
        %v1109 = vunpack.c.h.b16 %v412
        %v1110 = vunpack.c.l.b16 %v413
        %v1111 = vunpack.c.h.b16 %v413
        %v1112 = vunpack.c.l.b16 %v414
        %v1113 = vunpack.c.h.b16 %v414
        %v1114 = vunpack.c.l.b16 %v415
        %v1115 = vunpack.c.h.b16 %v415
        %v1116 = vunpack.c.l.b16 %v416
        %v1117 = vunpack.c.h.b16 %v416
        %v1118 = vunpack.c.l.b16 %v417
        %v1119 = vunpack.c.h.b16 %v417
        %v1120 = vunpack.c.l.b16 %v418
        %v1121 = vunpack.c.h.b16 %v418
        %v1122 = vunpack.c.l.b16 %v419
        %v1123 = vunpack.c.h.b16 %v419
        %v1124 = vunpack.c.l.b16 %v420
        %v1125 = vunpack.c.h.b16 %v420
        %v1126 = vunpack.c.l.b16 %v421
        %v1127 = vunpack.c.h.b16 %v421
        %v1128 = vunpack.c.l.b16 %v422
        %v1129 = vunpack.c.h.b16 %v422
        %v1130 = vunpack.c.l.b16 %v423
        %v1131 = vunpack.c.h.b16 %v423
        %v1132 = vunpack.c.l.b16 %v424
        %v1133 = vunpack.c.h.b16 %v424
        %v1134 = vunpack.c.l.b16 %v425
        %v1135 = vunpack.c.h.b16 %v425
        %v1136 = vunpack.c.l.b16 %v426
        %v1137 = vunpack.c.h.b16 %v426
        %v1138 = vunpack.c.l.b16 %v427
        %v1139 = vunpack.c.h.b16 %v427
        %v1140 = vunpack.c.l.b16 %v428
        %v1141 = vunpack.c.h.b16 %v428
        %v1142 = vunpack.c.l.b16 %v429
        %v1143 = vunpack.c.h.b16 %v429
        %v1144 = vunpack.c.l.b16 %v430
        %v1145 = vunpack.c.h.b16 %v430
        %v1146 = vunpack.c.l.b16 %v431
        %v1147 = vunpack.c.h.b16 %v431
        %v1148 = vunpack.c.l.b16 %v432
        %v1149 = vunpack.c.h.b16 %v432
        %v1150 = vunpack.c.l.b16 %v433
        %v1151 = vunpack.c.h.b16 %v433
        %v1152 = vunpack.c.l.b16 %v434
        %v1153 = vunpack.c.h.b16 %v434
        %v1154 = vunpack.c.l.b16 %v435
        %v1155 = vunpack.c.h.b16 %v435
        %v1156 = vunpack.c.l.b16 %v436
        %v1157 = vunpack.c.h.b16 %v436
        %v1158 = vunpack.c.l.b16 %v437
        %v1159 = vunpack.c.h.b16 %v437
        %v1160 = vunpack.c.l.b16 %v438
        %v1161 = vunpack.c.h.b16 %v438
        %v1162 = vunpack.c.l.b16 %v439
        %v1163 = vunpack.c.h.b16 %v439
        %v1164 = vunpack.c.l.b16 %v440
        %v1165 = vunpack.c.h.b16 %v440
        %v1166 = vunpack.c.l.b16 %v441
        %v1167 = vunpack.c.h.b16 %v441
        %v1168 = vunpack.c.l.b16 %v442
        %v1169 = vunpack.c.h.b16 %v442
        %v1170 = vunpack.c.l.b16 %v443
        %v1171 = vunpack.c.h.b16 %v443
        %v1172 = vunpack.c.l.b16 %v444
        %v1173 = vunpack.c.h.b16 %v444
        %v1174 = vunpack.c.l.b16 %v445
        %v1175 = vunpack.c.h.b16 %v445
        %v1176 = vunpack.c.l.b16 %v446
        %v1177 = vunpack.c.h.b16 %v446
        %v1178 = vunpack.c.l.b16 %v447
        %v1179 = vunpack.c.h.b16 %v447
        %v1180 = vunpack.c.l.b16 %v448
        %v1181 = vunpack.c.h.b16 %v448
        %v1182 = vunpack.c.l.b16 %v449
        %v1183 = vunpack.c.h.b16 %v449
        %v1184 = vunpack.c.l.b16 %v450
        %v1185 = vunpack.c.h.b16 %v450
        %v1186 = vunpack.c.l.b16 %v451
        %v1187 = vunpack.c.h.b16 %v451
        %v1188 = vunpack.c.l.b16 %v452
        %v1189 = vunpack.c.h.b16 %v452
        %v1190 = vunpack.c.l.b16 %v453
        %v1191 = vunpack.c.h.b16 %v453
        %v1192 = vunpack.c.l.b16 %v454
        %v1193 = vunpack.c.h.b16 %v454
        %v1194 = vunpack.c.l.b16 %v455
        %v1195 = vunpack.c.h.b16 %v455
        %v1196 = vunpack.c.l.b16 %v456
        %v1197 = vunpack.c.h.b16 %v456
        %v1198 = vunpack.c.l.b16 %v457
        %v1199 = vunpack.c.h.b16 %v457
        %v1200 = vunpack.c.l.b16 %v458
        %v1201 = vunpack.c.h.b16 %v458
        %v1202 = vunpack.c.l.b16 %v459
        %v1203 = vunpack.c.h.b16 %v459
        %v1204 = vunpack.c.l.b16 %v460
        %v1205 = vunpack.c.h.b16 %v460
        %v1206 = vunpack.c.l.b16 %v461
        %v1207 = vunpack.c.h.b16 %v461
        %v1208 = vunpack.c.l.b16 %v462
        %v1209 = vunpack.c.h.b16 %v462
        %v1210 = vunpack.c.l.b16 %v463
        %v1211 = vunpack.c.h.b16 %v463
        %v1212 = vunpack.c.l.b16 %v464
        %v1213 = vunpack.c.h.b16 %v464
        %v1214 = vunpack.c.l.b16 %v465
        %v1215 = vunpack.c.h.b16 %v465
        %v1216 = vunpack.c.l.b16 %v466
        %v1217 = vunpack.c.h.b16 %v466
        %v1218 = vunpack.c.l.b16 %v467
        %v1219 = vunpack.c.h.b16 %v467
        %v1220 = vunpack.c.l.b16 %v468
        %v1221 = vunpack.c.h.b16 %v468
        %v1222 = vunpack.c.l.b16 %v469
        %v1223 = vunpack.c.h.b16 %v469
        %v1224 = vunpack.c.l.b16 %v470
        %v1225 = vunpack.c.h.b16 %v470
        %v1226 = vunpack.c.l.b16 %v471
        %v1227 = vunpack.c.h.b16 %v471
        %v1228 = vunpack.c.l.b16 %v472
        %v1229 = vunpack.c.h.b16 %v472
        %v1230 = vunpack.c.l.b16 %v473
        %v1231 = vunpack.c.h.b16 %v473
        %v1232 = vunpack.c.l.b16 %v474
        %v1233 = vunpack.c.h.b16 %v474
        %v1234 = vunpack.c.l.b16 %v475
        %v1235 = vunpack.c.h.b16 %v475
        %v1236 = vunpack.c.l.b16 %v476
        %v1237 = vunpack.c.h.b16 %v476
        %v1238 = vunpack.c.l.b16 %v477
        %v1239 = vunpack.c.h.b16 %v477
        %v1240 = vunpack.c.l.b16 %v478
        %v1241 = vunpack.c.h.b16 %v478
        %v1242 = vunpack.c.l.b16 %v479
        %v1243 = vunpack.c.h.b16 %v479
        %v1244 = vunpack.c.l.b16 %v480
        %v1245 = vunpack.c.h.b16 %v480
        %v1246 = vunpack.c.l.b16 %v481
        %v1247 = vunpack.c.h.b16 %v481
        %v1248 = vunpack.c.l.b16 %v482
        %v1249 = vunpack.c.h.b16 %v482
        %v1250 = vunpack.c.l.b16 %v483
        %v1251 = vunpack.c.h.b16 %v483
        %v1252 = vunpack.c.l.b16 %v484
        %v1253 = vunpack.c.h.b16 %v484
        %v1254 = vunpack.c.l.b16 %v485
        %v1255 = vunpack.c.h.b16 %v485
        %v1256 = vunpack.c.l.b16 %v486
        %v1257 = vunpack.c.h.b16 %v486
        %v1258 = vunpack.c.l.b16 %v487
        %v1259 = vunpack.c.h.b16 %v487
        %v1260 = vunpack.c.l.b16 %v488
        %v1261 = vunpack.c.h.b16 %v488
        %v1262 = vunpack.c.l.b16 %v489
        %v1263 = vunpack.c.h.b16 %v489
        %v1264 = vunpack.c.l.b16 %v490
        %v1265 = vunpack.c.h.b16 %v490
        %v1266 = vunpack.c.l.b16 %v491
        %v1267 = vunpack.c.h.b16 %v491
        %v1268 = vunpack.c.l.b16 %v492
        %v1269 = vunpack.c.h.b16 %v492
        %v1270 = vunpack.c.l.b16 %v493
        %v1271 = vunpack.c.h.b16 %v493
        %v1272 = vunpack.c.l.b16 %v494
        %v1273 = vunpack.c.h.b16 %v494
        %v1274 = vunpack.c.l.b16 %v495
        %v1275 = vunpack.c.h.b16 %v495
        %v1276 = vunpack.c.l.b16 %v496
        %v1277 = vunpack.c.h.b16 %v496
        %v1278 = vunpack.c.l.b16 %v497
        %v1279 = vunpack.c.h.b16 %v497
        %v1280 = vunpack.c.l.b16 %v498
        %v1281 = vunpack.c.h.b16 %v498
        %v1282 = vunpack.c.l.b16 %v499
        %v1283 = vunpack.c.h.b16 %v499
        %v1284 = vunpack.c.l.b16 %v500
        %v1285 = vunpack.c.h.b16 %v500
        %v1286 = vunpack.c.l.b16 %v501
        %v1287 = vunpack.c.h.b16 %v501
        %v1288 = vunpack.c.l.b16 %v502
        %v1289 = vunpack.c.h.b16 %v502
        %v1290 = vunpack.c.l.b16 %v503
        %v1291 = vunpack.c.h.b16 %v503
        %v1292 = vunpack.c.l.b16 %v504
        %v1293 = vunpack.c.h.b16 %v504
        %v1294 = vunpack.c.l.b16 %v505
        %v1295 = vunpack.c.h.b16 %v505
        %v1296 = vunpack.c.l.b16 %v506
        %v1297 = vunpack.c.h.b16 %v506
        %v1298 = vunpack.c.l.b16 %v507
        %v1299 = vunpack.c.h.b16 %v507
        %v1300 = vunpack.c.l.b16 %v508
        %v1301 = vunpack.c.h.b16 %v508
        %v1302 = vunpack.c.l.b16 %v509
        %v1303 = vunpack.c.h.b16 %v509
        %v1304 = vunpack.c.l.b16 %v510
        %v1305 = vunpack.c.h.b16 %v510
        %v1306 = vunpack.c.l.b16 %v511
        %v1307 = vunpack.c.h.b16 %v511
        %v1308 = vunpack.c.l.b16 %v512
        %v1309 = vunpack.c.h.b16 %v512
        %v1310 = vunpack.c.l.b16 %v513
        %v1311 = vunpack.c.h.b16 %v513
        %v1312 = vunpack.c.l.b16 %v514
        %v1313 = vunpack.c.h.b16 %v514
        %v1314 = vunpack.c.l.b16 %v515
        %v1315 = vunpack.c.h.b16 %v515
        %v1316 = vunpack.c.l.b16 %v516
        %v1317 = vunpack.c.h.b16 %v516
        %v1318 = vunpack.c.l.b16 %v517
        %v1319 = vunpack.c.h.b16 %v517
        %v1320 = vunpack.c.l.b16 %v518
        %v1321 = vunpack.c.h.b16 %v518
        %v1322 = vunpack.c.l.b16 %v519
        %v1323 = vunpack.c.h.b16 %v519
        %v1324 = vunpack.c.l.b16 %v520
        %v1325 = vunpack.c.h.b16 %v520
        %v1326 = vunpack.c.l.b16 %v521
        %v1327 = vunpack.c.h.b16 %v521
        %v1328 = vunpack.c.l.b16 %v522
        %v1329 = vunpack.c.h.b16 %v522
        %v1330 = vunpack.c.l.b16 %v523
        %v1331 = vunpack.c.h.b16 %v523
        %v1332 = vunpack.c.l.b16 %v524
        %v1333 = vunpack.c.h.b16 %v524
        %v1334 = vunpack.c.l.b16 %v525
        %v1335 = vunpack.c.h.b16 %v525
        %v1336 = vunpack.c.l.b16 %v526
        %v1337 = vunpack.c.h.b16 %v526
        %v1338 = vunpack.c.l.b16 %v527
        %v1339 = vunpack.c.h.b16 %v527
        %v1340 = vunpack.c.l.b16 %v528
        %v1341 = vunpack.c.h.b16 %v528
        %v1342 = vunpack.c.l.b16 %v529
        %v1343 = vunpack.c.h.b16 %v529
        %v1344 = vunpack.c.l.b16 %v530
        %v1345 = vunpack.c.h.b16 %v530
        %v1346 = vunpack.c.l.b16 %v531
        %v1347 = vunpack.c.h.b16 %v531
        %v1348 = vunpack.c.l.b16 %v532
        %v1349 = vunpack.c.h.b16 %v532
        %v1350 = vunpack.c.l.b16 %v533
        %v1351 = vunpack.c.h.b16 %v533
        %v1352 = vunpack.c.l.b16 %v534
        %v1353 = vunpack.c.h.b16 %v534
        %v1354 = vunpack.c.l.b16 %v535
        %v1355 = vunpack.c.h.b16 %v535
        %v1356 = vunpack.c.l.b16 %v536
        %v1357 = vunpack.c.h.b16 %v536
        %v1358 = vunpack.c.l.b16 %v537
        %v1359 = vunpack.c.h.b16 %v537
        %v1360 = vunpack.c.l.b16 %v538
        %v1361 = vunpack.c.h.b16 %v538
        %v1362 = vunpack.c.l.b16 %v539
        %v1363 = vunpack.c.h.b16 %v539
        %v1364 = vunpack.c.l.b16 %v540
        %v1365 = vunpack.c.h.b16 %v540
        %v1366 = vunpack.c.l.b16 %v541
        %v1367 = vunpack.c.h.b16 %v541
        %v1368 = vunpack.c.l.b16 %v542
        %v1369 = vunpack.c.h.b16 %v542
        %v1370 = vunpack.c.l.b16 %v543
        %v1371 = vunpack.c.h.b16 %v543
        %v1372 = vunpack.c.l.b16 %v544
        %v1373 = vunpack.c.h.b16 %v544
        %v1374 = vunpack.c.l.b16 %v545
        %v1375 = vunpack.c.h.b16 %v545
        %v1376 = vunpack.c.l.b16 %v546
        %v1377 = vunpack.c.h.b16 %v546
        %v1378 = vunpack.c.l.b16 %v547
        %v1379 = vunpack.c.h.b16 %v547
        %v1380 = vunpack.c.l.b16 %v548
        %v1381 = vunpack.c.h.b16 %v548
        %v1382 = vunpack.c.l.b16 %v549
        %v1383 = vunpack.c.h.b16 %v549
        %v1384 = vunpack.c.l.b16 %v550
        %v1385 = vunpack.c.h.b16 %v550
        %v1386 = vunpack.c.l.b16 %v551
        %v1387 = vunpack.c.h.b16 %v551
        %v1388 = vunpack.c.l.b16 %v552
        %v1389 = vunpack.c.h.b16 %v552
        %v1390 = vunpack.c.l.b16 %v553
        %v1391 = vunpack.c.h.b16 %v553
        %v1392 = vunpack.c.l.b16 %v554
        %v1393 = vunpack.c.h.b16 %v554
        %v1394 = vunpack.c.l.b16 %v555
        %v1395 = vunpack.c.h.b16 %v555
        %v1396 = vunpack.c.l.b16 %v556
        %v1397 = vunpack.c.h.b16 %v556
        %v1398 = vunpack.c.l.b16 %v557
        %v1399 = vunpack.c.h.b16 %v557
        %v1400 = vunpack.c.l.b16 %v558
        %v1401 = vunpack.c.h.b16 %v558
        %v1402 = vunpack.c.l.b16 %v559
        %v1403 = vunpack.c.h.b16 %v559
        %v1404 = vunpack.c.l.b16 %v560
        %v1405 = vunpack.c.h.b16 %v560
        %v1406 = vunpack.c.l.b16 %v561
        %v1407 = vunpack.c.h.b16 %v561
        %v1408 = vunpack.c.l.b16 %v562
        %v1409 = vunpack.c.h.b16 %v562
        %v1410 = vunpack.c.l.b16 %v563
        %v1411 = vunpack.c.h.b16 %v563
        %v1412 = vunpack.c.l.b16 %v564
        %v1413 = vunpack.c.h.b16 %v564
        %v1414 = vunpack.c.l.b16 %v565
        %v1415 = vunpack.c.h.b16 %v565
        %v1416 = vunpack.c.l.b16 %v566
        %v1417 = vunpack.c.h.b16 %v566
        %v1418 = vunpack.c.l.b16 %v567
        %v1419 = vunpack.c.h.b16 %v567
        %v1420 = vunpack.c.l.b16 %v568
        %v1421 = vunpack.c.h.b16 %v568
        %v1422 = vunpack.c.l.b16 %v569
        %v1423 = vunpack.c.h.b16 %v569
        %v1424 = vunpack.c.l.b16 %v570
        %v1425 = vunpack.c.h.b16 %v570
        %v1426 = vunpack.c.l.b16 %v571
        %v1427 = vunpack.c.h.b16 %v571
        %v1428 = vunpack.c.l.b16 %v572
        %v1429 = vunpack.c.h.b16 %v572
        %v1430 = vunpack.c.l.b16 %v573
        %v1431 = vunpack.c.h.b16 %v573
        %v1432 = vunpack.c.l.b16 %v574
        %v1433 = vunpack.c.h.b16 %v574
        %v1434 = vunpack.c.l.b16 %v575
        %v1435 = vunpack.c.h.b16 %v575
        %v1436 = vunpack.c.l.b16 %v576
        %v1437 = vunpack.c.h.b16 %v576
        %v1438 = vunpack.c.l.b16 %v577
        %v1439 = vunpack.c.h.b16 %v577
        %v1440 = vunpack.c.l.b16 %v578
        %v1441 = vunpack.c.h.b16 %v578
        %v1442 = vunpack.c.l.b16 %v579
        %v1443 = vunpack.c.h.b16 %v579
        %v1444 = vunpack.c.l.b16 %v580
        %v1445 = vunpack.c.h.b16 %v580
        %v1446 = vunpack.c.l.b16 %v581
        %v1447 = vunpack.c.h.b16 %v581
        %v1448 = vunpack.c.l.b16 %v582
        %v1449 = vunpack.c.h.b16 %v582
        %v1450 = vunpack.c.l.b16 %v583
        %v1451 = vunpack.c.h.b16 %v583
        %v1452 = vunpack.c.l.b16 %v584
        %v1453 = vunpack.c.h.b16 %v584
        %v1454 = vunpack.c.l.b16 %v585
        %v1455 = vunpack.c.h.b16 %v585
        %v1456 = vunpack.c.l.b16 %v586
        %v1457 = vunpack.c.h.b16 %v586
        %v1458 = vunpack.c.l.b16 %v587
        %v1459 = vunpack.c.h.b16 %v587
        %v1460 = vunpack.c.l.b16 %v588
        %v1461 = vunpack.c.h.b16 %v588
        %v1462 = vunpack.c.l.b16 %v589
        %v1463 = vunpack.c.h.b16 %v589
        %v1464 = vunpack.c.l.b16 %v590
        %v1465 = vunpack.c.h.b16 %v590
        %v1466 = vunpack.c.l.b16 %v591
        %v1467 = vunpack.c.h.b16 %v591
        %v1468 = vunpack.c.l.b16 %v592
        %v1469 = vunpack.c.h.b16 %v592
        %v1470 = vunpack.c.l.b16 %v593
        %v1471 = vunpack.c.h.b16 %v593
        %v1472 = vunpack.c.l.b16 %v594
        %v1473 = vunpack.c.h.b16 %v594
        %v1474 = vunpack.c.l.b16 %v595
        %v1475 = vunpack.c.h.b16 %v595
        %v1476 = vunpack.c.l.b16 %v596
        %v1477 = vunpack.c.h.b16 %v596
        %v1478 = vunpack.c.l.b16 %v597
        %v1479 = vunpack.c.h.b16 %v597
        %v1480 = vunpack.c.l.b16 %v598
        %v1481 = vunpack.c.h.b16 %v598
        %v1482 = vunpack.c.l.b16 %v599
        %v1483 = vunpack.c.h.b16 %v599
        %v1484 = vunpack.c.l.b16 %v600
        %v1485 = vunpack.c.h.b16 %v600
        %v1486 = vunpack.c.l.b16 %v601
        %v1487 = vunpack.c.h.b16 %v601
        %v1488 = vunpack.c.l.b16 %v602
        %v1489 = vunpack.c.h.b16 %v602
        %v1490 = vunpack.c.l.b16 %v603
        %v1491 = vunpack.c.h.b16 %v603
        %v1492 = vunpack.c.l.b16 %v604
        %v1493 = vunpack.c.h.b16 %v604
        %v1494 = vunpack.c.l.b16 %v605
        %v1495 = vunpack.c.h.b16 %v605
        %v1496 = vunpack.c.l.b16 %v606
        %v1497 = vunpack.c.h.b16 %v606
        %v1498 = vunpack.c.l.b16 %v607
        %v1499 = vunpack.c.h.b16 %v607
        %v1500 = vunpack.c.l.b16 %v608
        %v1501 = vunpack.c.h.b16 %v608
        %v1502 = vunpack.c.l.b16 %v609
        %v1503 = vunpack.c.h.b16 %v609
        %v1504 = vunpack.c.l.b16 %v610
        %v1505 = vunpack.c.h.b16 %v610
        %v1506 = vunpack.c.l.b16 %v611
        %v1507 = vunpack.c.h.b16 %v611
        %v1508 = vunpack.c.l.b16 %v612
        %v1509 = vunpack.c.h.b16 %v612
        %v1510 = vunpack.c.l.b16 %v613
        %v1511 = vunpack.c.h.b16 %v613
        %v1512 = vunpack.c.l.b16 %v614
        %v1513 = vunpack.c.h.b16 %v614
        %v1514 = vunpack.c.l.b16 %v615
        %v1515 = vunpack.c.h.b16 %v615
        %v1516 = vunpack.c.l.b16 %v616
        %v1517 = vunpack.c.h.b16 %v616
        %v1518 = vunpack.c.l.b16 %v617
        %v1519 = vunpack.c.h.b16 %v617
        %v1520 = vunpack.c.l.b16 %v618
        %v1521 = vunpack.c.h.b16 %v618
        %v1522 = vunpack.c.l.b16 %v619
        %v1523 = vunpack.c.h.b16 %v619
        %v1524 = vunpack.c.l.b16 %v620
        %v1525 = vunpack.c.h.b16 %v620
        %v1526 = vunpack.c.l.b16 %v621
        %v1527 = vunpack.c.h.b16 %v621
        %v1528 = vunpack.c.l.b16 %v622
        %v1529 = vunpack.c.h.b16 %v622
        %v1530 = vunpack.c.l.b16 %v623
        %v1531 = vunpack.c.h.b16 %v623
        %v1532 = vunpack.c.l.b16 %v624
        %v1533 = vunpack.c.h.b16 %v624
        %v1534 = vunpack.c.l.b16 %v625
        %v1535 = vunpack.c.h.b16 %v625
        %v1536 = vunpack.c.l.b16 %v626
        %v1537 = vunpack.c.h.b16 %v626
        %v1538 = vunpack.c.l.b16 %v627
        %v1539 = vunpack.c.h.b16 %v627
        %v1540 = vunpack.c.l.b16 %v628
        %v1541 = vunpack.c.h.b16 %v628
        %v1542 = vunpack.c.l.b16 %v629
        %v1543 = vunpack.c.h.b16 %v629
        %v1544 = vunpack.c.l.b16 %v630
        %v1545 = vunpack.c.h.b16 %v630
        %v1546 = vunpack.c.l.b16 %v631
        %v1547 = vunpack.c.h.b16 %v631
        %v1548 = vunpack.c.l.b16 %v632
        %v1549 = vunpack.c.h.b16 %v632
        %v1550 = vpack.c.b16 %v978, %v974
        %v1551 = vpack.c.b16 %v979, %v975
        %v1552 = vpack.c.b16 %v980, %v976
        %v1553 = vpack.c.b16 %v981, %v977
        %v1554 = vpack.c.b16 %v986, %v982
        %v1555 = vpack.c.b16 %v987, %v983
        %v1556 = vpack.c.b16 %v988, %v984
        %v1557 = vpack.c.b16 %v989, %v985
        %v1558 = vpack.c.b16 %v994, %v990
        %v1559 = vpack.c.b16 %v995, %v991
        %v1560 = vpack.c.b16 %v996, %v992
        %v1561 = vpack.c.b16 %v997, %v993
        %v1562 = vpack.c.b16 %v1002, %v998
        %v1563 = vpack.c.b16 %v1003, %v999
        %v1564 = vpack.c.b16 %v1004, %v1000
        %v1565 = vpack.c.b16 %v1005, %v1001
        %v1566 = vpack.c.b16 %v1010, %v1006
        %v1567 = vpack.c.b16 %v1011, %v1007
        %v1568 = vpack.c.b16 %v1012, %v1008
        %v1569 = vpack.c.b16 %v1013, %v1009
        %v1570 = vpack.c.b16 %v1018, %v1014
        %v1571 = vpack.c.b16 %v1019, %v1015
        %v1572 = vpack.c.b16 %v1020, %v1016
        %v1573 = vpack.c.b16 %v1021, %v1017
        %v1574 = vpack.c.b16 %v1026, %v1022
        %v1575 = vpack.c.b16 %v1027, %v1023
        %v1576 = vpack.c.b16 %v1028, %v1024
        %v1577 = vpack.c.b16 %v1029, %v1025
        %v1578 = vpack.c.b16 %v1034, %v1030
        %v1579 = vpack.c.b16 %v1035, %v1031
        %v1580 = vpack.c.b16 %v1036, %v1032
        %v1581 = vpack.c.b16 %v1037, %v1033
        %v1582 = vpack.c.b16 %v1042, %v1038
        %v1583 = vpack.c.b16 %v1043, %v1039
        %v1584 = vpack.c.b16 %v1044, %v1040
        %v1585 = vpack.c.b16 %v1045, %v1041
        %v1586 = vpack.c.b16 %v1050, %v1046
        %v1587 = vpack.c.b16 %v1051, %v1047
        %v1588 = vpack.c.b16 %v1052, %v1048
        %v1589 = vpack.c.b16 %v1053, %v1049
        %v1590 = vpack.c.b16 %v1058, %v1054
        %v1591 = vpack.c.b16 %v1059, %v1055
        %v1592 = vpack.c.b16 %v1060, %v1056
        %v1593 = vpack.c.b16 %v1061, %v1057
        %v1594 = vpack.c.b16 %v1066, %v1062
        %v1595 = vpack.c.b16 %v1067, %v1063
        %v1596 = vpack.c.b16 %v1068, %v1064
        %v1597 = vpack.c.b16 %v1069, %v1065
        %v1598 = vpack.c.b16 %v1074, %v1070
        %v1599 = vpack.c.b16 %v1075, %v1071
        %v1600 = vpack.c.b16 %v1076, %v1072
        %v1601 = vpack.c.b16 %v1077, %v1073
        %v1602 = vpack.c.b16 %v1082, %v1078
        %v1603 = vpack.c.b16 %v1083, %v1079
        %v1604 = vpack.c.b16 %v1084, %v1080
        %v1605 = vpack.c.b16 %v1085, %v1081
        %v1606 = vpack.c.b16 %v1090, %v1086
        %v1607 = vpack.c.b16 %v1091, %v1087
        %v1608 = vpack.c.b16 %v1092, %v1088
        %v1609 = vpack.c.b16 %v1093, %v1089
        %v1610 = vpack.c.b16 %v1098, %v1094
        %v1611 = vpack.c.b16 %v1099, %v1095
        %v1612 = vpack.c.b16 %v1100, %v1096
        %v1613 = vpack.c.b16 %v1101, %v1097
        %v1614 = vpack.c.b16 %v1106, %v1102
        %v1615 = vpack.c.b16 %v1107, %v1103
        %v1616 = vpack.c.b16 %v1108, %v1104
        %v1617 = vpack.c.b16 %v1109, %v1105
        %v1618 = vpack.c.b16 %v1114, %v1110
        %v1619 = vpack.c.b16 %v1115, %v1111
        %v1620 = vpack.c.b16 %v1116, %v1112
        %v1621 = vpack.c.b16 %v1117, %v1113
        %v1622 = vpack.c.b16 %v1122, %v1118
        %v1623 = vpack.c.b16 %v1123, %v1119
        %v1624 = vpack.c.b16 %v1124, %v1120
        %v1625 = vpack.c.b16 %v1125, %v1121
        %v1626 = vpack.c.b16 %v1130, %v1126
        %v1627 = vpack.c.b16 %v1131, %v1127
        %v1628 = vpack.c.b16 %v1132, %v1128
        %v1629 = vpack.c.b16 %v1133, %v1129
        %v1630 = vpack.c.b16 %v1138, %v1134
        %v1631 = vpack.c.b16 %v1139, %v1135
        %v1632 = vpack.c.b16 %v1140, %v1136
        %v1633 = vpack.c.b16 %v1141, %v1137
        %v1634 = vpack.c.b16 %v1146, %v1142
        %v1635 = vpack.c.b16 %v1147, %v1143
        %v1636 = vpack.c.b16 %v1148, %v1144
        %v1637 = vpack.c.b16 %v1149, %v1145
        %v1638 = vpack.c.b16 %v1154, %v1150
        %v1639 = vpack.c.b16 %v1155, %v1151
        %v1640 = vpack.c.b16 %v1156, %v1152
        %v1641 = vpack.c.b16 %v1157, %v1153
        %v1642 = vpack.c.b16 %v1162, %v1158
        %v1643 = vpack.c.b16 %v1163, %v1159
        %v1644 = vpack.c.b16 %v1164, %v1160
        %v1645 = vpack.c.b16 %v1165, %v1161
        %v1646 = vpack.c.b16 %v1170, %v1166
        %v1647 = vpack.c.b16 %v1171, %v1167
        %v1648 = vpack.c.b16 %v1172, %v1168
        %v1649 = vpack.c.b16 %v1173, %v1169
        %v1650 = vpack.c.b16 %v1178, %v1174
        %v1651 = vpack.c.b16 %v1179, %v1175
        %v1652 = vpack.c.b16 %v1180, %v1176
        %v1653 = vpack.c.b16 %v1181, %v1177
        %v1654 = vpack.c.b16 %v1186, %v1182
        %v1655 = vpack.c.b16 %v1187, %v1183
        %v1656 = vpack.c.b16 %v1188, %v1184
        %v1657 = vpack.c.b16 %v1189, %v1185
        %v1658 = vpack.c.b16 %v1194, %v1190
        %v1659 = vpack.c.b16 %v1195, %v1191
        %v1660 = vpack.c.b16 %v1196, %v1192
        %v1661 = vpack.c.b16 %v1197, %v1193
        %v1662 = vpack.c.b16 %v1202, %v1198
        %v1663 = vpack.c.b16 %v1203, %v1199
        %v1664 = vpack.c.b16 %v1204, %v1200
        %v1665 = vpack.c.b16 %v1205, %v1201
        %v1666 = vpack.c.b16 %v1210, %v1206
        %v1667 = vpack.c.b16 %v1211, %v1207
        %v1668 = vpack.c.b16 %v1212, %v1208
        %v1669 = vpack.c.b16 %v1213, %v1209
        %v1670 = vpack.c.b16 %v1218, %v1214
        %v1671 = vpack.c.b16 %v1219, %v1215
        %v1672 = vpack.c.b16 %v1220, %v1216
        %v1673 = vpack.c.b16 %v1221, %v1217
        %v1674 = vpack.c.b16 %v1226, %v1222
        %v1675 = vpack.c.b16 %v1227, %v1223
        %v1676 = vpack.c.b16 %v1228, %v1224
        %v1677 = vpack.c.b16 %v1229, %v1225
        %v1678 = vpack.c.b16 %v1234, %v1230
        %v1679 = vpack.c.b16 %v1235, %v1231
        %v1680 = vpack.c.b16 %v1236, %v1232
        %v1681 = vpack.c.b16 %v1237, %v1233
        %v1682 = vpack.c.b16 %v1242, %v1238
        %v1683 = vpack.c.b16 %v1243, %v1239
        %v1684 = vpack.c.b16 %v1244, %v1240
        %v1685 = vpack.c.b16 %v1245, %v1241
        %v1686 = vpack.c.b16 %v1250, %v1246
        %v1687 = vpack.c.b16 %v1251, %v1247
        %v1688 = vpack.c.b16 %v1252, %v1248
        %v1689 = vpack.c.b16 %v1253, %v1249
        %v1690 = vpack.c.b16 %v1258, %v1254
        %v1691 = vpack.c.b16 %v1259, %v1255
        %v1692 = vpack.c.b16 %v1260, %v1256
        %v1693 = vpack.c.b16 %v1261, %v1257
        %v1694 = vpack.c.b16 %v1266, %v1262
        %v1695 = vpack.c.b16 %v1267, %v1263
        %v1696 = vpack.c.b16 %v1268, %v1264
        %v1697 = vpack.c.b16 %v1269, %v1265
        %v1698 = vpack.c.b16 %v1274, %v1270
        %v1699 = vpack.c.b16 %v1275, %v1271
        %v1700 = vpack.c.b16 %v1276, %v1272
        %v1701 = vpack.c.b16 %v1277, %v1273
        %v1702 = vpack.c.b16 %v1282, %v1278
        %v1703 = vpack.c.b16 %v1283, %v1279
        %v1704 = vpack.c.b16 %v1284, %v1280
        %v1705 = vpack.c.b16 %v1285, %v1281
        %v1706 = vpack.c.b16 %v1290, %v1286
        %v1707 = vpack.c.b16 %v1291, %v1287
        %v1708 = vpack.c.b16 %v1292, %v1288
        %v1709 = vpack.c.b16 %v1293, %v1289
        %v1710 = vpack.c.b16 %v1298, %v1294
        %v1711 = vpack.c.b16 %v1299, %v1295
        %v1712 = vpack.c.b16 %v1300, %v1296
        %v1713 = vpack.c.b16 %v1301, %v1297
        %v1714 = vpack.c.b16 %v1306, %v1302
        %v1715 = vpack.c.b16 %v1307, %v1303
        %v1716 = vpack.c.b16 %v1308, %v1304
        %v1717 = vpack.c.b16 %v1309, %v1305
        %v1718 = vpack.c.b16 %v1314, %v1310
        %v1719 = vpack.c.b16 %v1315, %v1311
        %v1720 = vpack.c.b16 %v1316, %v1312
        %v1721 = vpack.c.b16 %v1317, %v1313
        %v1722 = vpack.c.b16 %v1322, %v1318
        %v1723 = vpack.c.b16 %v1323, %v1319
        %v1724 = vpack.c.b16 %v1324, %v1320
        %v1725 = vpack.c.b16 %v1325, %v1321
        %v1726 = vpack.c.b16 %v1330, %v1326
        %v1727 = vpack.c.b16 %v1331, %v1327
        %v1728 = vpack.c.b16 %v1332, %v1328
        %v1729 = vpack.c.b16 %v1333, %v1329
        %v1730 = vpack.c.b16 %v1338, %v1334
        %v1731 = vpack.c.b16 %v1339, %v1335
        %v1732 = vpack.c.b16 %v1340, %v1336
        %v1733 = vpack.c.b16 %v1341, %v1337
        %v1734 = vpack.c.b16 %v1346, %v1342
        %v1735 = vpack.c.b16 %v1347, %v1343
        %v1736 = vpack.c.b16 %v1348, %v1344
        %v1737 = vpack.c.b16 %v1349, %v1345
        %v1738 = vpack.c.b16 %v1354, %v1350
        %v1739 = vpack.c.b16 %v1355, %v1351
        %v1740 = vpack.c.b16 %v1356, %v1352
        %v1741 = vpack.c.b16 %v1357, %v1353
        %v1742 = vpack.c.b16 %v1362, %v1358
        %v1743 = vpack.c.b16 %v1363, %v1359
        %v1744 = vpack.c.b16 %v1364, %v1360
        %v1745 = vpack.c.b16 %v1365, %v1361
        %v1746 = vpack.c.b16 %v1370, %v1366
        %v1747 = vpack.c.b16 %v1371, %v1367
        %v1748 = vpack.c.b16 %v1372, %v1368
        %v1749 = vpack.c.b16 %v1373, %v1369
        %v1750 = vpack.c.b16 %v1378, %v1374
        %v1751 = vpack.c.b16 %v1379, %v1375
        %v1752 = vpack.c.b16 %v1380, %v1376
        %v1753 = vpack.c.b16 %v1381, %v1377
        %v1754 = vpack.c.b16 %v1386, %v1382
        %v1755 = vpack.c.b16 %v1387, %v1383
        %v1756 = vpack.c.b16 %v1388, %v1384
        %v1757 = vpack.c.b16 %v1389, %v1385
        %v1758 = vpack.c.b16 %v1394, %v1390
        %v1759 = vpack.c.b16 %v1395, %v1391
        %v1760 = vpack.c.b16 %v1396, %v1392
        %v1761 = vpack.c.b16 %v1397, %v1393
        %v1762 = vpack.c.b16 %v1402, %v1398
        %v1763 = vpack.c.b16 %v1403, %v1399
        %v1764 = vpack.c.b16 %v1404, %v1400
        %v1765 = vpack.c.b16 %v1405, %v1401
        %v1766 = vpack.c.b16 %v1410, %v1406
        %v1767 = vpack.c.b16 %v1411, %v1407
        %v1768 = vpack.c.b16 %v1412, %v1408
        %v1769 = vpack.c.b16 %v1413, %v1409
        %v1770 = vpack.c.b16 %v1418, %v1414
        %v1771 = vpack.c.b16 %v1419, %v1415
        %v1772 = vpack.c.b16 %v1420, %v1416
        %v1773 = vpack.c.b16 %v1421, %v1417
        %v1774 = vpack.c.b16 %v1426, %v1422
        %v1775 = vpack.c.b16 %v1427, %v1423
        %v1776 = vpack.c.b16 %v1428, %v1424
        %v1777 = vpack.c.b16 %v1429, %v1425
        %v1778 = vpack.c.b16 %v1434, %v1430
        %v1779 = vpack.c.b16 %v1435, %v1431
        %v1780 = vpack.c.b16 %v1436, %v1432
        %v1781 = vpack.c.b16 %v1437, %v1433
        %v1782 = vpack.c.b16 %v1442, %v1438
        %v1783 = vpack.c.b16 %v1443, %v1439
        %v1784 = vpack.c.b16 %v1444, %v1440
        %v1785 = vpack.c.b16 %v1445, %v1441
        %v1786 = vpack.c.b16 %v1450, %v1446
        %v1787 = vpack.c.b16 %v1451, %v1447
        %v1788 = vpack.c.b16 %v1452, %v1448
        %v1789 = vpack.c.b16 %v1453, %v1449
        %v1790 = vpack.c.b16 %v1458, %v1454
        %v1791 = vpack.c.b16 %v1459, %v1455
        %v1792 = vpack.c.b16 %v1460, %v1456
        %v1793 = vpack.c.b16 %v1461, %v1457
        %v1794 = vpack.c.b16 %v1466, %v1462
        %v1795 = vpack.c.b16 %v1467, %v1463
        %v1796 = vpack.c.b16 %v1468, %v1464
        %v1797 = vpack.c.b16 %v1469, %v1465
        %v1798 = vpack.c.b16 %v1474, %v1470
        %v1799 = vpack.c.b16 %v1475, %v1471
        %v1800 = vpack.c.b16 %v1476, %v1472
        %v1801 = vpack.c.b16 %v1477, %v1473
        %v1802 = vpack.c.b16 %v1482, %v1478
        %v1803 = vpack.c.b16 %v1483, %v1479
        %v1804 = vpack.c.b16 %v1484, %v1480
        %v1805 = vpack.c.b16 %v1485, %v1481
        %v1806 = vpack.c.b16 %v1490, %v1486
        %v1807 = vpack.c.b16 %v1491, %v1487
        %v1808 = vpack.c.b16 %v1492, %v1488
        %v1809 = vpack.c.b16 %v1493, %v1489
        %v1810 = vpack.c.b16 %v1498, %v1494
        %v1811 = vpack.c.b16 %v1499, %v1495
        %v1812 = vpack.c.b16 %v1500, %v1496
        %v1813 = vpack.c.b16 %v1501, %v1497
        %v1814 = vpack.c.b16 %v1506, %v1502
        %v1815 = vpack.c.b16 %v1507, %v1503
        %v1816 = vpack.c.b16 %v1508, %v1504
        %v1817 = vpack.c.b16 %v1509, %v1505
        %v1818 = vpack.c.b16 %v1514, %v1510
        %v1819 = vpack.c.b16 %v1515, %v1511
        %v1820 = vpack.c.b16 %v1516, %v1512
        %v1821 = vpack.c.b16 %v1517, %v1513
        %v1822 = vpack.c.b16 %v1522, %v1518
        %v1823 = vpack.c.b16 %v1523, %v1519
        %v1824 = vpack.c.b16 %v1524, %v1520
        %v1825 = vpack.c.b16 %v1525, %v1521
        %v1826 = vpack.c.b16 %v1530, %v1526
        %v1827 = vpack.c.b16 %v1531, %v1527
        %v1828 = vpack.c.b16 %v1532, %v1528
        %v1829 = vpack.c.b16 %v1533, %v1529
        %v1830 = vpack.c.b16 %v1538, %v1534
        %v1831 = vpack.c.b16 %v1539, %v1535
        %v1832 = vpack.c.b16 %v1540, %v1536
        %v1833 = vpack.c.b16 %v1541, %v1537
        %v1834 = vpack.c.b16 %v1546, %v1542
        %v1835 = vpack.c.b16 %v1547, %v1543
        %v1836 = vpack.c.b16 %v1548, %v1544
        %v1837 = vpack.c.b16 %v1549, %v1545
        %2126 = vmatprep.subr.bf16.mxu0 %v1551
        %2127 = vmatpush1.bf16.msra.mxu0 %v1550
        %2128 = vmatprep.subr.bf16.mxu0 %v1555
        %2129 = vmatpush1.bf16.msra.mxu0 %v1554
        %2130 = vmatprep.subr.bf16.mxu0 %v1559
        %2131 = vmatpush1.bf16.msra.mxu0 %v1558
        %2132 = vmatprep.subr.bf16.mxu0 %v1563
        %2133 = vmatpush1.bf16.msra.mxu0 %v1562
        %2134 = vmatprep.subr.bf16.mxu0 %v1567
        %2135 = vmatpush1.bf16.msra.mxu0 %v1566
        %2136 = vmatprep.subr.bf16.mxu0 %v1571
        %2137 = vmatpush1.bf16.msra.mxu0 %v1570
        %2138 = vmatprep.subr.bf16.mxu0 %v1575
        %2139 = vmatpush1.bf16.msra.mxu0 %v1574
        %2140 = vmatprep.subr.bf16.mxu0 %v1579
        %2141 = vmatpush1.bf16.msra.mxu0 %v1578
        %2142 = vmatprep.subr.bf16.mxu0 %v1583
        %2143 = vmatpush1.bf16.msra.mxu0 %v1582
        %2144 = vmatprep.subr.bf16.mxu0 %v1587
        %2145 = vmatpush1.bf16.msra.mxu0 %v1586
        %2146 = vmatprep.subr.bf16.mxu0 %v1591
        %2147 = vmatpush1.bf16.msra.mxu0 %v1590
        %2148 = vmatprep.subr.bf16.mxu0 %v1595
        %2149 = vmatpush1.bf16.msra.mxu0 %v1594
        %2150 = vmatprep.subr.bf16.mxu0 %v1599
        %2151 = vmatpush1.bf16.msra.mxu0 %v1598
        %2152 = vmatprep.subr.bf16.mxu0 %v1603
        %2153 = vmatpush1.bf16.msra.mxu0 %v1602
        %2154 = vmatprep.subr.bf16.mxu0 %v1607
        %2155 = vmatpush1.bf16.msra.mxu0 %v1606
        %2156 = vmatprep.subr.bf16.mxu0 %v1611
        %2157 = vmatpush1.bf16.msra.mxu0 %v1610
        %2158 = vmatprep.mubr.bf16.mxu0 %v651
        %2159 = vmatmul.mubr.bf16.gmra.mrb[0].mxu0 %v643
        %v2160 = vpop.f32.mrb[0].mxu0
        %v2161 = vadd.f32 0.0, %v2160
        %v2162 = vpop.f32.mrb[0].mxu0
        %v2163 = vadd.f32 0.0, %v2162
        %v2164 = vpop.f32.mrb[0].mxu0
        %v2165 = vpop.f32.mrb[0].mxu0
        %2166 = vdwg.mxu0
        %2167 = vmatprep.subr.bf16.mxu0 %v1615
        %2168 = vmatpush1.bf16.msra.mxu0 %v1614
        %2169 = vmatprep.subr.bf16.mxu0 %v1619
        %2170 = vmatpush1.bf16.msra.mxu0 %v1618
        %2171 = vmatprep.subr.bf16.mxu0 %v1623
        %2172 = vmatpush1.bf16.msra.mxu0 %v1622
        %2173 = vmatprep.subr.bf16.mxu0 %v1627
        %2174 = vmatpush1.bf16.msra.mxu0 %v1626
        %2175 = vmatprep.subr.bf16.mxu0 %v1631
        %2176 = vmatpush1.bf16.msra.mxu0 %v1630
        %2177 = vmatprep.subr.bf16.mxu0 %v1635
        %2178 = vmatpush1.bf16.msra.mxu0 %v1634
        %2179 = vmatprep.subr.bf16.mxu0 %v1639
        %2180 = vmatpush1.bf16.msra.mxu0 %v1638
        %2181 = vmatprep.subr.bf16.mxu0 %v1643
        %2182 = vmatpush1.bf16.msra.mxu0 %v1642
        %2183 = vmatprep.subr.bf16.mxu0 %v1647
        %2184 = vmatpush1.bf16.msra.mxu0 %v1646
        %2185 = vmatprep.subr.bf16.mxu0 %v1651
        %2186 = vmatpush1.bf16.msra.mxu0 %v1650
        %2187 = vmatprep.subr.bf16.mxu0 %v1655
        %2188 = vmatpush1.bf16.msra.mxu0 %v1654
        %2189 = vmatprep.subr.bf16.mxu0 %v1659
        %2190 = vmatpush1.bf16.msra.mxu0 %v1658
        %2191 = vmatprep.subr.bf16.mxu0 %v1663
        %2192 = vmatpush1.bf16.msra.mxu0 %v1662
        %2193 = vmatprep.subr.bf16.mxu0 %v1667
        %2194 = vmatpush1.bf16.msra.mxu0 %v1666
        %2195 = vmatprep.subr.bf16.mxu0 %v1671
        %2196 = vmatpush1.bf16.msra.mxu0 %v1670
        %2197 = vmatprep.subr.bf16.mxu0 %v1675
        %2198 = vmatpush1.bf16.msra.mxu0 %v1674
        %2199 = vmatprep.mubr.bf16.mxu0 %v652
        %2200 = vmatmul.mubr.bf16.gmra.mrb[0].mxu0 %v650
        %v2201 = vpop.f32.mrb[0].mxu0
        %v2202 = vadd.f32 %v2161, %v2201
        %v2203 = vpop.f32.mrb[0].mxu0
        %v2204 = vadd.f32 %v2163, %v2203
        %v2205 = vpop.f32.mrb[0].mxu0
        %v2206 = vpop.f32.mrb[0].mxu0
        %2207 = vdwg.mxu0
        %2208 = vmatprep.subr.bf16.mxu0 %v1679
        %2209 = vmatpush1.bf16.msra.mxu0 %v1678
        %2210 = vmatprep.subr.bf16.mxu0 %v1683
        %2211 = vmatpush1.bf16.msra.mxu0 %v1682
        %2212 = vmatprep.subr.bf16.mxu0 %v1687
        %2213 = vmatpush1.bf16.msra.mxu0 %v1686
        %2214 = vmatprep.subr.bf16.mxu0 %v1691
        %2215 = vmatpush1.bf16.msra.mxu0 %v1690
        %2216 = vmatprep.subr.bf16.mxu0 %v1695
        %2217 = vmatpush1.bf16.msra.mxu0 %v1694
        %2218 = vmatprep.subr.bf16.mxu0 %v1699
        %2219 = vmatpush1.bf16.msra.mxu0 %v1698
        %2220 = vmatprep.subr.bf16.mxu0 %v1703
        %2221 = vmatpush1.bf16.msra.mxu0 %v1702
        %2222 = vmatprep.subr.bf16.mxu0 %v1707
        %2223 = vmatpush1.bf16.msra.mxu0 %v1706
        %2224 = vmatprep.subr.bf16.mxu0 %v1711
        %2225 = vmatpush1.bf16.msra.mxu0 %v1710
        %2226 = vmatprep.subr.bf16.mxu0 %v1715
        %2227 = vmatpush1.bf16.msra.mxu0 %v1714
        %2228 = vmatprep.subr.bf16.mxu0 %v1719
        %2229 = vmatpush1.bf16.msra.mxu0 %v1718
        %2230 = vmatprep.subr.bf16.mxu0 %v1723
        %2231 = vmatpush1.bf16.msra.mxu0 %v1722
        %2232 = vmatprep.subr.bf16.mxu0 %v1727
        %2233 = vmatpush1.bf16.msra.mxu0 %v1726
        %2234 = vmatprep.subr.bf16.mxu0 %v1731
        %2235 = vmatpush1.bf16.msra.mxu0 %v1730
        %2236 = vmatprep.subr.bf16.mxu0 %v1735
        %2237 = vmatpush1.bf16.msra.mxu0 %v1734
        %2238 = vmatprep.subr.bf16.mxu0 %v1739
        %2239 = vmatpush1.bf16.msra.mxu0 %v1738
        %2240 = vmatprep.mubr.bf16.mxu0 %v668
        %2241 = vmatmul.mubr.bf16.gmra.mrb[0].mxu0 %v660
        %v2242 = vpop.f32.mrb[0].mxu0
        %v2243 = vadd.f32 %v2202, %v2242
        %v2244 = vpop.f32.mrb[0].mxu0
        %v2245 = vadd.f32 %v2204, %v2244
        %v2246 = vpop.f32.mrb[0].mxu0
        %v2247 = vpop.f32.mrb[0].mxu0
        %2248 = vdwg.mxu0
        %2249 = vmatprep.subr.bf16.mxu0 %v1743
        %2250 = vmatpush1.bf16.msra.mxu0 %v1742
        %2251 = vmatprep.subr.bf16.mxu0 %v1747
        %2252 = vmatpush1.bf16.msra.mxu0 %v1746
        %2253 = vmatprep.subr.bf16.mxu0 %v1751
        %2254 = vmatpush1.bf16.msra.mxu0 %v1750
        %2255 = vmatprep.subr.bf16.mxu0 %v1755
        %2256 = vmatpush1.bf16.msra.mxu0 %v1754
        %2257 = vmatprep.subr.bf16.mxu0 %v1759
        %2258 = vmatpush1.bf16.msra.mxu0 %v1758
        %2259 = vmatprep.subr.bf16.mxu0 %v1763
        %2260 = vmatpush1.bf16.msra.mxu0 %v1762
        %2261 = vmatprep.subr.bf16.mxu0 %v1767
        %2262 = vmatpush1.bf16.msra.mxu0 %v1766
        %2263 = vmatprep.subr.bf16.mxu0 %v1771
        %2264 = vmatpush1.bf16.msra.mxu0 %v1770
        %2265 = vmatprep.subr.bf16.mxu0 %v1775
        %2266 = vmatpush1.bf16.msra.mxu0 %v1774
        %2267 = vmatprep.subr.bf16.mxu0 %v1779
        %2268 = vmatpush1.bf16.msra.mxu0 %v1778
        %2269 = vmatprep.subr.bf16.mxu0 %v1783
        %2270 = vmatpush1.bf16.msra.mxu0 %v1782
        %2271 = vmatprep.subr.bf16.mxu0 %v1787
        %2272 = vmatpush1.bf16.msra.mxu0 %v1786
        %2273 = vmatprep.subr.bf16.mxu0 %v1791
        %2274 = vmatpush1.bf16.msra.mxu0 %v1790
        %2275 = vmatprep.subr.bf16.mxu0 %v1795
        %2276 = vmatpush1.bf16.msra.mxu0 %v1794
        %2277 = vmatprep.subr.bf16.mxu0 %v1799
        %2278 = vmatpush1.bf16.msra.mxu0 %v1798
        %2279 = vmatprep.subr.bf16.mxu0 %v1803
        %2280 = vmatpush1.bf16.msra.mxu0 %v1802
        %2281 = vmatprep.mubr.bf16.mxu0 %v669
        %2282 = vmatmul.mubr.bf16.gmra.mrb[0].mxu0 %v667
        %v2283 = vpop.f32.mrb[0].mxu0
        %v2284 = vadd.f32 %v2243, %v2283
        %v2285 = vpop.f32.mrb[0].mxu0
        %v2286 = vadd.f32 %v2245, %v2285
        %v2287 = vpop.f32.mrb[0].mxu0
        %v2288 = vpop.f32.mrb[0].mxu0
        %2289 = vdwg.mxu0
        %2290 = vmatprep.subr.bf16.mxu0 %v1807
        %2291 = vmatpush1.bf16.msra.mxu0 %v1806
        %2292 = vmatprep.subr.bf16.mxu0 %v1811
        %2293 = vmatpush1.bf16.msra.mxu0 %v1810
        %2294 = vmatprep.subr.bf16.mxu0 %v1815
        %2295 = vmatpush1.bf16.msra.mxu0 %v1814
        %2296 = vmatprep.subr.bf16.mxu0 %v1819
        %2297 = vmatpush1.bf16.msra.mxu0 %v1818
        %2298 = vmatprep.subr.bf16.mxu0 %v1823
        %2299 = vmatpush1.bf16.msra.mxu0 %v1822
        %2300 = vmatprep.subr.bf16.mxu0 %v1827
        %2301 = vmatpush1.bf16.msra.mxu0 %v1826
        %2302 = vmatprep.subr.bf16.mxu0 %v1831
        %2303 = vmatpush1.bf16.msra.mxu0 %v1830
        %2304 = vmatprep.subr.bf16.mxu0 %v1835
        %2305 = vmatpush1.bf16.msra.mxu0 %v1834
        %2306 = vmatprep.subr.bf16.mxu0 0
        %2307 = vmatpush1.bf16.msra.mxu0 0
        %2308 = vmatprep.subr.bf16.mxu0 0
        %2309 = vmatpush1.bf16.msra.mxu0 0
        %2310 = vmatprep.subr.bf16.mxu0 0
        %2311 = vmatpush1.bf16.msra.mxu0 0
        %2312 = vmatprep.subr.bf16.mxu0 0
        %2313 = vmatpush1.bf16.msra.mxu0 0
        %2314 = vmatprep.subr.bf16.mxu0 0
        %2315 = vmatpush1.bf16.msra.mxu0 0
        %2316 = vmatprep.subr.bf16.mxu0 0
        %2317 = vmatpush1.bf16.msra.mxu0 0
        %2318 = vmatprep.subr.bf16.mxu0 0
        %2319 = vmatpush1.bf16.msra.mxu0 0
        %2320 = vmatprep.subr.bf16.mxu0 0
        %2321 = vmatpush1.bf16.msra.mxu0 0
        %2322 = vmatprep.mubr.bf16.mxu0 0
        %2323 = vmatmul.mubr.bf16.gmra.mrb[0].mxu0 %v676
        %v2324 = vpop.f32.mrb[0].mxu0
        %v2325 = vadd.f32 %v2284, %v2324
        %v2326 = vpop.f32.mrb[0].mxu0
        %v2327 = vadd.f32 %v2286, %v2326
        %v2328 = vpop.f32.mrb[0].mxu0
        %v2329 = vpop.f32.mrb[0].mxu0
        %2330 = vdwg.mxu0
        %2331 = vmatprep.subr.bf16.mxu0 %v1553
        %2332 = vmatpush1.bf16.msra.mxu0 %v1552
        %2333 = vmatprep.subr.bf16.mxu0 %v1557
        %2334 = vmatpush1.bf16.msra.mxu0 %v1556
        %2335 = vmatprep.subr.bf16.mxu0 %v1561
        %2336 = vmatpush1.bf16.msra.mxu0 %v1560
        %2337 = vmatprep.subr.bf16.mxu0 %v1565
        %2338 = vmatpush1.bf16.msra.mxu0 %v1564
        %2339 = vmatprep.subr.bf16.mxu0 %v1569
        %2340 = vmatpush1.bf16.msra.mxu0 %v1568
        %2341 = vmatprep.subr.bf16.mxu0 %v1573
        %2342 = vmatpush1.bf16.msra.mxu0 %v1572
        %2343 = vmatprep.subr.bf16.mxu0 %v1577
        %2344 = vmatpush1.bf16.msra.mxu0 %v1576
        %2345 = vmatprep.subr.bf16.mxu0 %v1581
        %2346 = vmatpush1.bf16.msra.mxu0 %v1580
        %2347 = vmatprep.subr.bf16.mxu0 %v1585
        %2348 = vmatpush1.bf16.msra.mxu0 %v1584
        %2349 = vmatprep.subr.bf16.mxu0 %v1589
        %2350 = vmatpush1.bf16.msra.mxu0 %v1588
        %2351 = vmatprep.subr.bf16.mxu0 %v1593
        %2352 = vmatpush1.bf16.msra.mxu0 %v1592
        %2353 = vmatprep.subr.bf16.mxu0 %v1597
        %2354 = vmatpush1.bf16.msra.mxu0 %v1596
        %2355 = vmatprep.subr.bf16.mxu0 %v1601
        %2356 = vmatpush1.bf16.msra.mxu0 %v1600
        %2357 = vmatprep.subr.bf16.mxu0 %v1605
        %2358 = vmatpush1.bf16.msra.mxu0 %v1604
        %2359 = vmatprep.subr.bf16.mxu0 %v1609
        %2360 = vmatpush1.bf16.msra.mxu0 %v1608
        %2361 = vmatprep.subr.bf16.mxu0 %v1613
        %2362 = vmatpush1.bf16.msra.mxu0 %v1612
        %2363 = vmatprep.mubr.bf16.mxu0 %v651
        %2364 = vmatmul.mubr.bf16.gmra.mrb[0].mxu0 %v643
        %v2365 = vpop.f32.mrb[0].mxu0
        %v2366 = vadd.f32 0.0, %v2365
        %v2367 = vpop.f32.mrb[0].mxu0
        %v2368 = vadd.f32 0.0, %v2367
        %v2369 = vpop.f32.mrb[0].mxu0
        %v2370 = vpop.f32.mrb[0].mxu0
        %2371 = vdwg.mxu0
        %2372 = vmatprep.subr.bf16.mxu0 %v1617
        %2373 = vmatpush1.bf16.msra.mxu0 %v1616
        %2374 = vmatprep.subr.bf16.mxu0 %v1621
        %2375 = vmatpush1.bf16.msra.mxu0 %v1620
        %2376 = vmatprep.subr.bf16.mxu0 %v1625
        %2377 = vmatpush1.bf16.msra.mxu0 %v1624
        %2378 = vmatprep.subr.bf16.mxu0 %v1629
        %2379 = vmatpush1.bf16.msra.mxu0 %v1628
        %2380 = vmatprep.subr.bf16.mxu0 %v1633
        %2381 = vmatpush1.bf16.msra.mxu0 %v1632
        %2382 = vmatprep.subr.bf16.mxu0 %v1637
        %2383 = vmatpush1.bf16.msra.mxu0 %v1636
        %2384 = vmatprep.subr.bf16.mxu0 %v1641
        %2385 = vmatpush1.bf16.msra.mxu0 %v1640
        %2386 = vmatprep.subr.bf16.mxu0 %v1645
        %2387 = vmatpush1.bf16.msra.mxu0 %v1644
        %2388 = vmatprep.subr.bf16.mxu0 %v1649
        %2389 = vmatpush1.bf16.msra.mxu0 %v1648
        %2390 = vmatprep.subr.bf16.mxu0 %v1653
        %2391 = vmatpush1.bf16.msra.mxu0 %v1652
        %2392 = vmatprep.subr.bf16.mxu0 %v1657
        %2393 = vmatpush1.bf16.msra.mxu0 %v1656
        %2394 = vmatprep.subr.bf16.mxu0 %v1661
        %2395 = vmatpush1.bf16.msra.mxu0 %v1660
        %2396 = vmatprep.subr.bf16.mxu0 %v1665
        %2397 = vmatpush1.bf16.msra.mxu0 %v1664
        %2398 = vmatprep.subr.bf16.mxu0 %v1669
        %2399 = vmatpush1.bf16.msra.mxu0 %v1668
        %2400 = vmatprep.subr.bf16.mxu0 %v1673
        %2401 = vmatpush1.bf16.msra.mxu0 %v1672
        %2402 = vmatprep.subr.bf16.mxu0 %v1677
        %2403 = vmatpush1.bf16.msra.mxu0 %v1676
        %2404 = vmatprep.mubr.bf16.mxu0 %v652
        %2405 = vmatmul.mubr.bf16.gmra.mrb[0].mxu0 %v650
        %v2406 = vpop.f32.mrb[0].mxu0
        %v2407 = vadd.f32 %v2366, %v2406
        %v2408 = vpop.f32.mrb[0].mxu0
        %v2409 = vadd.f32 %v2368, %v2408
        %v2410 = vpop.f32.mrb[0].mxu0
        %v2411 = vpop.f32.mrb[0].mxu0
        %2412 = vdwg.mxu0
        %2413 = vmatprep.subr.bf16.mxu0 %v1681
        %2414 = vmatpush1.bf16.msra.mxu0 %v1680
        %2415 = vmatprep.subr.bf16.mxu0 %v1685
        %2416 = vmatpush1.bf16.msra.mxu0 %v1684
        %2417 = vmatprep.subr.bf16.mxu0 %v1689
        %2418 = vmatpush1.bf16.msra.mxu0 %v1688
        %2419 = vmatprep.subr.bf16.mxu0 %v1693
        %2420 = vmatpush1.bf16.msra.mxu0 %v1692
        %2421 = vmatprep.subr.bf16.mxu0 %v1697
        %2422 = vmatpush1.bf16.msra.mxu0 %v1696
        %2423 = vmatprep.subr.bf16.mxu0 %v1701
        %2424 = vmatpush1.bf16.msra.mxu0 %v1700
        %2425 = vmatprep.subr.bf16.mxu0 %v1705
        %2426 = vmatpush1.bf16.msra.mxu0 %v1704
        %2427 = vmatprep.subr.bf16.mxu0 %v1709
        %2428 = vmatpush1.bf16.msra.mxu0 %v1708
        %2429 = vmatprep.subr.bf16.mxu0 %v1713
        %2430 = vmatpush1.bf16.msra.mxu0 %v1712
        %2431 = vmatprep.subr.bf16.mxu0 %v1717
        %2432 = vmatpush1.bf16.msra.mxu0 %v1716
        %2433 = vmatprep.subr.bf16.mxu0 %v1721
        %2434 = vmatpush1.bf16.msra.mxu0 %v1720
        %2435 = vmatprep.subr.bf16.mxu0 %v1725
        %2436 = vmatpush1.bf16.msra.mxu0 %v1724
        %2437 = vmatprep.subr.bf16.mxu0 %v1729
        %2438 = vmatpush1.bf16.msra.mxu0 %v1728
        %2439 = vmatprep.subr.bf16.mxu0 %v1733
        %2440 = vmatpush1.bf16.msra.mxu0 %v1732
        %2441 = vmatprep.subr.bf16.mxu0 %v1737
        %2442 = vmatpush1.bf16.msra.mxu0 %v1736
        %2443 = vmatprep.subr.bf16.mxu0 %v1741
        %2444 = vmatpush1.bf16.msra.mxu0 %v1740
        %2445 = vmatprep.mubr.bf16.mxu0 %v668
        %2446 = vmatmul.mubr.bf16.gmra.mrb[0].mxu0 %v660
        %v2447 = vpop.f32.mrb[0].mxu0
        %v2448 = vadd.f32 %v2407, %v2447
        %v2449 = vpop.f32.mrb[0].mxu0
        %v2450 = vadd.f32 %v2409, %v2449
        %v2451 = vpop.f32.mrb[0].mxu0
        %v2452 = vpop.f32.mrb[0].mxu0
        %2453 = vdwg.mxu0
        %2454 = vmatprep.subr.bf16.mxu0 %v1745
        %2455 = vmatpush1.bf16.msra.mxu0 %v1744
        %2456 = vmatprep.subr.bf16.mxu0 %v1749
        %2457 = vmatpush1.bf16.msra.mxu0 %v1748
        %2458 = vmatprep.subr.bf16.mxu0 %v1753
        %2459 = vmatpush1.bf16.msra.mxu0 %v1752
        %2460 = vmatprep.subr.bf16.mxu0 %v1757
        %2461 = vmatpush1.bf16.msra.mxu0 %v1756
        %2462 = vmatprep.subr.bf16.mxu0 %v1761
        %2463 = vmatpush1.bf16.msra.mxu0 %v1760
        %2464 = vmatprep.subr.bf16.mxu0 %v1765
        %2465 = vmatpush1.bf16.msra.mxu0 %v1764
        %2466 = vmatprep.subr.bf16.mxu0 %v1769
        %2467 = vmatpush1.bf16.msra.mxu0 %v1768
        %2468 = vmatprep.subr.bf16.mxu0 %v1773
        %2469 = vmatpush1.bf16.msra.mxu0 %v1772
        %2470 = vmatprep.subr.bf16.mxu0 %v1777
        %2471 = vmatpush1.bf16.msra.mxu0 %v1776
        %2472 = vmatprep.subr.bf16.mxu0 %v1781
        %2473 = vmatpush1.bf16.msra.mxu0 %v1780
        %2474 = vmatprep.subr.bf16.mxu0 %v1785
        %2475 = vmatpush1.bf16.msra.mxu0 %v1784
        %2476 = vmatprep.subr.bf16.mxu0 %v1789
        %2477 = vmatpush1.bf16.msra.mxu0 %v1788
        %2478 = vmatprep.subr.bf16.mxu0 %v1793
        %2479 = vmatpush1.bf16.msra.mxu0 %v1792
        %2480 = vmatprep.subr.bf16.mxu0 %v1797
        %2481 = vmatpush1.bf16.msra.mxu0 %v1796
        %2482 = vmatprep.subr.bf16.mxu0 %v1801
        %2483 = vmatpush1.bf16.msra.mxu0 %v1800
        %2484 = vmatprep.subr.bf16.mxu0 %v1805
        %2485 = vmatpush1.bf16.msra.mxu0 %v1804
        %2486 = vmatprep.mubr.bf16.mxu0 %v669
        %2487 = vmatmul.mubr.bf16.gmra.mrb[0].mxu0 %v667
        %v2488 = vpop.f32.mrb[0].mxu0
        %v2489 = vadd.f32 %v2448, %v2488
        %v2490 = vpop.f32.mrb[0].mxu0
        %v2491 = vadd.f32 %v2450, %v2490
        %v2492 = vpop.f32.mrb[0].mxu0
        %v2493 = vpop.f32.mrb[0].mxu0
        %2494 = vdwg.mxu0
        %2495 = vmatprep.subr.bf16.mxu0 %v1809
        %2496 = vmatpush1.bf16.msra.mxu0 %v1808
        %2497 = vmatprep.subr.bf16.mxu0 %v1813
        %2498 = vmatpush1.bf16.msra.mxu0 %v1812
        %2499 = vmatprep.subr.bf16.mxu0 %v1817
        %2500 = vmatpush1.bf16.msra.mxu0 %v1816
        %2501 = vmatprep.subr.bf16.mxu0 %v1821
        %2502 = vmatpush1.bf16.msra.mxu0 %v1820
        %2503 = vmatprep.subr.bf16.mxu0 %v1825
        %2504 = vmatpush1.bf16.msra.mxu0 %v1824
        %2505 = vmatprep.subr.bf16.mxu0 %v1829
        %2506 = vmatpush1.bf16.msra.mxu0 %v1828
        %2507 = vmatprep.subr.bf16.mxu0 %v1833
        %2508 = vmatpush1.bf16.msra.mxu0 %v1832
        %2509 = vmatprep.subr.bf16.mxu0 %v1837
        %2510 = vmatpush1.bf16.msra.mxu0 %v1836
        %2511 = vmatprep.subr.bf16.mxu0 0
        %2512 = vmatpush1.bf16.msra.mxu0 0
        %2513 = vmatprep.subr.bf16.mxu0 0
        %2514 = vmatpush1.bf16.msra.mxu0 0
        %2515 = vmatprep.subr.bf16.mxu0 0
        %2516 = vmatpush1.bf16.msra.mxu0 0
        %2517 = vmatprep.subr.bf16.mxu0 0
        %2518 = vmatpush1.bf16.msra.mxu0 0
        %2519 = vmatprep.subr.bf16.mxu0 0
        %2520 = vmatpush1.bf16.msra.mxu0 0
        %2521 = vmatprep.subr.bf16.mxu0 0
        %2522 = vmatpush1.bf16.msra.mxu0 0
        %2523 = vmatprep.subr.bf16.mxu0 0
        %2524 = vmatpush1.bf16.msra.mxu0 0
        %2525 = vmatprep.subr.bf16.mxu0 0
        %2526 = vmatpush1.bf16.msra.mxu0 0
        %2527 = vmatprep.mubr.bf16.mxu0 0
        %2528 = vmatmul.mubr.bf16.gmra.mrb[0].mxu0 %v676
        %v2529 = vpop.f32.mrb[0].mxu0
        %v2530 = vadd.f32 %v2489, %v2529
        %v2531 = vpop.f32.mrb[0].mxu0
        %v2532 = vadd.f32 %v2491, %v2531
        %v2533 = vpop.f32.mrb[0].mxu0
        %v2534 = vpop.f32.mrb[0].mxu0
        %2535 = vdwg.mxu0
        %v2540 = vcombine.low %v2325, %v2327
        %v2541 = vcombine.low %v2530, %v2532
        %v2544 = vadd.f32 %v340, %v2540
        %v2545 = vadd.f32 %v341, %v2541
        %2546 = vst [vmem:[#allocation2] sm:$0xff] %v2544
        %2547 = vst [vmem:[#allocation2 + $0x8] sm:$0xff] %v2545
        %p2548 = scmp.eq.s32.totalorder %s26, 7
        // Predicated region
        $region61: #{critic_forward_pallas.1} parent=39 // pred_check
          %p2549 = pneg %p2548
        $region62: #{critic_forward_pallas.1} parent=39 // pred_check_branch
          %2551 = sbr.rel (%p2549) target = $region64
        $region63: #{critic_forward_pallas.1} parent=39 // pred_region
          %v2552 = vld [vmem:[#allocation2] sm:$0xff]
          %v2553 = vld [vmem:[#allocation2 + $0x8] sm:$0xff]
          %v2554 = vld [vmem:[#allocation5] sm:$0xf]
          %v2556 = vlaneseq
          %v2557 = vshrl.u32 %v2556, 7
          %v2558 = vsub.s32 0, %v2557
          %v2559 = vrot.slane %v2554, %v2558
          %v2560 = vlaneseq
          %v2561 = vshrl.u32 %v2560, 7
          %v2562 = vsub.s32 1, %v2561
          %v2563 = vrot.slane %v2554, %v2562
          %v2564 = vlaneseq
          %v2565 = vshrl.u32 %v2564, 7
          %v2566 = vsub.s32 2, %v2565
          %v2567 = vrot.slane %v2554, %v2566
          %v2568 = vlaneseq
          %v2569 = vshrl.u32 %v2568, 7
          %v2570 = vsub.s32 3, %v2569
          %v2571 = vrot.slane %v2554, %v2570
          %v2572 = vcombine.low %v2559, %v2563
          %v2573 = vcombine.low %v2567, %v2571
          %v2576 = vadd.f32 %v2552, %v2572
          %v2577 = vadd.f32 %v2553, %v2573
          %v2578 = vmax.f32 %v2576, 0.0
          %v2579 = vmax.f32 %v2577, 0.0
          %v2582 = vcombine.high %v2578, %v2578
          %v2583 = vcombine.high %v2579, %v2579
          %v2586 = vpack.c.bf16 %v2578, %v2578
          %v2587 = vpack.c.bf16 %v2582, %v2582
          %v2588 = vpack.c.bf16 %v2579, %v2579
          %v2589 = vpack.c.bf16 %v2583, %v2583
          %v2590 = vld [vmem:[#allocation7] sm:$0xf]
          %v2591 = vld [vmem:[#allocation7 + $0x4] sm:$0xf]
          %v2592 = vld [vmem:[#allocation7 + $0x8] sm:$0xf]
          %v2593 = vld [vmem:[#allocation7 + $0xc] sm:$0xf]
          %v2594 = vld [vmem:[#allocation7 + $0x10] sm:$0xf]
          %v2595 = vld [vmem:[#allocation7 + $0x14] sm:$0xf]
          %v2596 = vld [vmem:[#allocation7 + $0x18] sm:$0xf]
          %v2597 = vld [vmem:[#allocation7 + $0x1c] sm:$0xf]
          %v2598 = vld [vmem:[#allocation7 + $0x20] sm:$0xf]
          %v2599 = vld [vmem:[#allocation7 + $0x24] sm:$0xf]
          %v2600 = vld [vmem:[#allocation7 + $0x28] sm:$0xf]
          %v2601 = vld [vmem:[#allocation7 + $0x2c] sm:$0xf]
          %v2602 = vld [vmem:[#allocation7 + $0x30] sm:$0xf]
          %v2603 = vld [vmem:[#allocation7 + $0x34] sm:$0xf]
          %v2604 = vld [vmem:[#allocation7 + $0x38] sm:$0xf]
          %v2605 = vld [vmem:[#allocation7 + $0x3c] sm:$0xf]
          %v2606 = vld [vmem:[#allocation7 + $0x40] sm:$0xf]
          %v2607 = vld [vmem:[#allocation7 + $0x44] sm:$0xf]
          %v2608 = vld [vmem:[#allocation7 + $0x48] sm:$0xf]
          %v2609 = vld [vmem:[#allocation7 + $0x4c] sm:$0xf]
          %v2610 = vld [vmem:[#allocation7 + $0x50] sm:$0xf]
          %v2611 = vld [vmem:[#allocation7 + $0x54] sm:$0xf]
          %v2612 = vld [vmem:[#allocation7 + $0x58] sm:$0xf]
          %v2613 = vld [vmem:[#allocation7 + $0x5c] sm:$0xf]
          %v2614 = vld [vmem:[#allocation7 + $0x60] sm:$0xf]
          %v2615 = vld [vmem:[#allocation7 + $0x64] sm:$0xf]
          %v2616 = vld [vmem:[#allocation7 + $0x68] sm:$0xf]
          %v2617 = vld [vmem:[#allocation7 + $0x6c] sm:$0xf]
          %v2618 = vld [vmem:[#allocation7 + $0x70] sm:$0xf]
          %v2619 = vld [vmem:[#allocation7 + $0x74] sm:$0xf]
          %v2620 = vld [vmem:[#allocation7 + $0x78] sm:$0xf]
          %v2621 = vld [vmem:[#allocation7 + $0x7c] sm:$0xf]
          %v2622 = vld [vmem:[#allocation7 + $0x80] sm:$0xf]
          %v2623 = vld [vmem:[#allocation7 + $0x84] sm:$0xf]
          %v2624 = vld [vmem:[#allocation7 + $0x88] sm:$0xf]
          %v2625 = vld [vmem:[#allocation7 + $0x8c] sm:$0xf]
          %v2626 = vld [vmem:[#allocation7 + $0x90] sm:$0xf]
          %v2627 = vld [vmem:[#allocation7 + $0x94] sm:$0xf]
          %v2628 = vld [vmem:[#allocation7 + $0x98] sm:$0xf]
          %v2629 = vld [vmem:[#allocation7 + $0x9c] sm:$0xf]
          %v2630 = vld [vmem:[#allocation7 + $0xa0] sm:$0xf]
          %v2631 = vld [vmem:[#allocation7 + $0xa4] sm:$0xf]
          %v2632 = vld [vmem:[#allocation7 + $0xa8] sm:$0xf]
          %v2633 = vld [vmem:[#allocation7 + $0xac] sm:$0xf]
          %v2634 = vld [vmem:[#allocation7 + $0xb0] sm:$0xf]
          %v2635 = vld [vmem:[#allocation7 + $0xb4] sm:$0xf]
          %v2636 = vld [vmem:[#allocation7 + $0xb8] sm:$0xf]
          %v2637 = vld [vmem:[#allocation7 + $0xbc] sm:$0xf]
          %v2638 = vld [vmem:[#allocation7 + $0xc0] sm:$0xf]
          %v2639 = vld [vmem:[#allocation7 + $0xc4] sm:$0xf]
          %v2640 = vld [vmem:[#allocation7 + $0xc8] sm:$0xf]
          %v2641 = vld [vmem:[#allocation7 + $0xcc] sm:$0xf]
          %v2642 = vld [vmem:[#allocation7 + $0xd0] sm:$0xf]
          %v2643 = vld [vmem:[#allocation7 + $0xd4] sm:$0xf]
          %v2644 = vld [vmem:[#allocation7 + $0xd8] sm:$0xf]
          %v2645 = vld [vmem:[#allocation7 + $0xdc] sm:$0xf]
          %v2646 = vld [vmem:[#allocation7 + $0xe0] sm:$0xf]
          %v2647 = vld [vmem:[#allocation7 + $0xe4] sm:$0xf]
          %v2648 = vld [vmem:[#allocation7 + $0xe8] sm:$0xf]
          %v2649 = vld [vmem:[#allocation7 + $0xec] sm:$0xf]
          %v2650 = vld [vmem:[#allocation7 + $0xf0] sm:$0xf]
          %v2651 = vld [vmem:[#allocation7 + $0xf4] sm:$0xf]
          %v2652 = vld [vmem:[#allocation7 + $0xf8] sm:$0xf]
          %v2653 = vld [vmem:[#allocation7 + $0xfc] sm:$0xf]
          %v2654 = vld [vmem:[#allocation8] sm:$0x1]
          %v2656 = vlaneseq
          %v2657 = vshrl.u32 %v2656, 7
          %v2658 = vsub.s32 0, %v2657
          %v2659 = vrot.slane %v2654, %v2658
          %v2725 = vunpack.c.l.b16 %v2590
          %v2726 = vunpack.c.l.b16 %v2591
          %v2727 = vunpack.c.l.b16 %v2592
          %v2728 = vunpack.c.l.b16 %v2593
          %v2729 = vunpack.c.l.b16 %v2594
          %v2730 = vunpack.c.l.b16 %v2595
          %v2731 = vunpack.c.l.b16 %v2596
          %v2732 = vunpack.c.l.b16 %v2597
          %v2733 = vunpack.c.l.b16 %v2598
          %v2734 = vunpack.c.l.b16 %v2599
          %v2735 = vunpack.c.l.b16 %v2600
          %v2736 = vunpack.c.l.b16 %v2601
          %v2737 = vunpack.c.l.b16 %v2602
          %v2738 = vunpack.c.l.b16 %v2603
          %v2739 = vunpack.c.l.b16 %v2604
          %v2740 = vunpack.c.l.b16 %v2605
          %v2741 = vunpack.c.l.b16 %v2606
          %v2742 = vunpack.c.l.b16 %v2607
          %v2743 = vunpack.c.l.b16 %v2608
          %v2744 = vunpack.c.l.b16 %v2609
          %v2745 = vunpack.c.l.b16 %v2610
          %v2746 = vunpack.c.l.b16 %v2611
          %v2747 = vunpack.c.l.b16 %v2612
          %v2748 = vunpack.c.l.b16 %v2613
          %v2749 = vunpack.c.l.b16 %v2614
          %v2750 = vunpack.c.l.b16 %v2615
          %v2751 = vunpack.c.l.b16 %v2616
          %v2752 = vunpack.c.l.b16 %v2617
          %v2753 = vunpack.c.l.b16 %v2618
          %v2754 = vunpack.c.l.b16 %v2619
          %v2755 = vunpack.c.l.b16 %v2620
          %v2756 = vunpack.c.l.b16 %v2621
          %v2757 = vunpack.c.l.b16 %v2622
          %v2758 = vunpack.c.l.b16 %v2623
          %v2759 = vunpack.c.l.b16 %v2624
          %v2760 = vunpack.c.l.b16 %v2625
          %v2761 = vunpack.c.l.b16 %v2626
          %v2762 = vunpack.c.l.b16 %v2627
          %v2763 = vunpack.c.l.b16 %v2628
          %v2764 = vunpack.c.l.b16 %v2629
          %v2765 = vunpack.c.l.b16 %v2630
          %v2766 = vunpack.c.l.b16 %v2631
          %v2767 = vunpack.c.l.b16 %v2632
          %v2768 = vunpack.c.l.b16 %v2633
          %v2769 = vunpack.c.l.b16 %v2634
          %v2770 = vunpack.c.l.b16 %v2635
          %v2771 = vunpack.c.l.b16 %v2636
          %v2772 = vunpack.c.l.b16 %v2637
          %v2773 = vunpack.c.l.b16 %v2638
          %v2774 = vunpack.c.l.b16 %v2639
          %v2775 = vunpack.c.l.b16 %v2640
          %v2776 = vunpack.c.l.b16 %v2641
          %v2777 = vunpack.c.l.b16 %v2642
          %v2778 = vunpack.c.l.b16 %v2643
          %v2779 = vunpack.c.l.b16 %v2644
          %v2780 = vunpack.c.l.b16 %v2645
          %v2781 = vunpack.c.l.b16 %v2646
          %v2782 = vunpack.c.l.b16 %v2647
          %v2783 = vunpack.c.l.b16 %v2648
          %v2784 = vunpack.c.l.b16 %v2649
          %v2785 = vunpack.c.l.b16 %v2650
          %v2786 = vunpack.c.l.b16 %v2651
          %v2787 = vunpack.c.l.b16 %v2652
          %v2788 = vunpack.c.l.b16 %v2653
          %v2789 = vpack.c.b16 %v2726, %v2725
          %v2790 = vpack.c.b16 %v2728, %v2727
          %v2791 = vpack.c.b16 %v2730, %v2729
          %v2792 = vpack.c.b16 %v2732, %v2731
          %v2793 = vpack.c.b16 %v2734, %v2733
          %v2794 = vpack.c.b16 %v2736, %v2735
          %v2795 = vpack.c.b16 %v2738, %v2737
          %v2796 = vpack.c.b16 %v2740, %v2739
          %v2797 = vpack.c.b16 %v2742, %v2741
          %v2798 = vpack.c.b16 %v2744, %v2743
          %v2799 = vpack.c.b16 %v2746, %v2745
          %v2800 = vpack.c.b16 %v2748, %v2747
          %v2801 = vpack.c.b16 %v2750, %v2749
          %v2802 = vpack.c.b16 %v2752, %v2751
          %v2803 = vpack.c.b16 %v2754, %v2753
          %v2804 = vpack.c.b16 %v2756, %v2755
          %v2805 = vpack.c.b16 %v2758, %v2757
          %v2806 = vpack.c.b16 %v2760, %v2759
          %v2807 = vpack.c.b16 %v2762, %v2761
          %v2808 = vpack.c.b16 %v2764, %v2763
          %v2809 = vpack.c.b16 %v2766, %v2765
          %v2810 = vpack.c.b16 %v2768, %v2767
          %v2811 = vpack.c.b16 %v2770, %v2769
          %v2812 = vpack.c.b16 %v2772, %v2771
          %v2813 = vpack.c.b16 %v2774, %v2773
          %v2814 = vpack.c.b16 %v2776, %v2775
          %v2815 = vpack.c.b16 %v2778, %v2777
          %v2816 = vpack.c.b16 %v2780, %v2779
          %v2817 = vpack.c.b16 %v2782, %v2781
          %v2818 = vpack.c.b16 %v2784, %v2783
          %v2819 = vpack.c.b16 %v2786, %v2785
          %v2820 = vpack.c.b16 %v2788, %v2787
          %2853 = vmatprep.subr.bf16.mxu0 0
          %2854 = vmatpush1.bf16.msra.mxu0 %v2789
          %2855 = vmatprep.subr.bf16.mxu0 0
          %2856 = vmatpush1.bf16.msra.mxu0 %v2790
          %2857 = vmatprep.subr.bf16.mxu0 0
          %2858 = vmatpush1.bf16.msra.mxu0 %v2791
          %2859 = vmatprep.subr.bf16.mxu0 0
          %2860 = vmatpush1.bf16.msra.mxu0 %v2792
          %2861 = vmatprep.subr.bf16.mxu0 0
          %2862 = vmatpush1.bf16.msra.mxu0 %v2793
          %2863 = vmatprep.subr.bf16.mxu0 0
          %2864 = vmatpush1.bf16.msra.mxu0 %v2794
          %2865 = vmatprep.subr.bf16.mxu0 0
          %2866 = vmatpush1.bf16.msra.mxu0 %v2795
          %2867 = vmatprep.subr.bf16.mxu0 0
          %2868 = vmatpush1.bf16.msra.mxu0 %v2796
          %2869 = vmatprep.subr.bf16.mxu0 0
          %2870 = vmatpush1.bf16.msra.mxu0 %v2797
          %2871 = vmatprep.subr.bf16.mxu0 0
          %2872 = vmatpush1.bf16.msra.mxu0 %v2798
          %2873 = vmatprep.subr.bf16.mxu0 0
          %2874 = vmatpush1.bf16.msra.mxu0 %v2799
          %2875 = vmatprep.subr.bf16.mxu0 0
          %2876 = vmatpush1.bf16.msra.mxu0 %v2800
          %2877 = vmatprep.subr.bf16.mxu0 0
          %2878 = vmatpush1.bf16.msra.mxu0 %v2801
          %2879 = vmatprep.subr.bf16.mxu0 0
          %2880 = vmatpush1.bf16.msra.mxu0 %v2802
          %2881 = vmatprep.subr.bf16.mxu0 0
          %2882 = vmatpush1.bf16.msra.mxu0 %v2803
          %2883 = vmatprep.subr.bf16.mxu0 0
          %2884 = vmatpush1.bf16.msra.mxu0 %v2804
          %2885 = vmatprep.mubr.bf16.mxu0 %v2587
          %2886 = vmatmul.mubr.bf16.gmra.mrb[0].mxu0 %v2586
          %v2887 = vpop.f32.mrb[0].mxu0
          %v2888 = vadd.f32 %v2659, %v2887
          %v2889 = vpop.f32.mrb[0].mxu0
          %v2890 = vpop.f32.mrb[0].mxu0
          %v2891 = vpop.f32.mrb[0].mxu0
          %2892 = vdwg.mxu0
          %2893 = vmatprep.subr.bf16.mxu0 0
          %2894 = vmatpush1.bf16.msra.mxu0 %v2805
          %2895 = vmatprep.subr.bf16.mxu0 0
          %2896 = vmatpush1.bf16.msra.mxu0 %v2806
          %2897 = vmatprep.subr.bf16.mxu0 0
          %2898 = vmatpush1.bf16.msra.mxu0 %v2807
          %2899 = vmatprep.subr.bf16.mxu0 0
          %2900 = vmatpush1.bf16.msra.mxu0 %v2808
          %2901 = vmatprep.subr.bf16.mxu0 0
          %2902 = vmatpush1.bf16.msra.mxu0 %v2809
          %2903 = vmatprep.subr.bf16.mxu0 0
          %2904 = vmatpush1.bf16.msra.mxu0 %v2810
          %2905 = vmatprep.subr.bf16.mxu0 0
          %2906 = vmatpush1.bf16.msra.mxu0 %v2811
          %2907 = vmatprep.subr.bf16.mxu0 0
          %2908 = vmatpush1.bf16.msra.mxu0 %v2812
          %2909 = vmatprep.subr.bf16.mxu0 0
          %2910 = vmatpush1.bf16.msra.mxu0 %v2813
          %2911 = vmatprep.subr.bf16.mxu0 0
          %2912 = vmatpush1.bf16.msra.mxu0 %v2814
          %2913 = vmatprep.subr.bf16.mxu0 0
          %2914 = vmatpush1.bf16.msra.mxu0 %v2815
          %2915 = vmatprep.subr.bf16.mxu0 0
          %2916 = vmatpush1.bf16.msra.mxu0 %v2816
          %2917 = vmatprep.subr.bf16.mxu0 0
          %2918 = vmatpush1.bf16.msra.mxu0 %v2817
          %2919 = vmatprep.subr.bf16.mxu0 0
          %2920 = vmatpush1.bf16.msra.mxu0 %v2818
          %2921 = vmatprep.subr.bf16.mxu0 0
          %2922 = vmatpush1.bf16.msra.mxu0 %v2819
          %2923 = vmatprep.subr.bf16.mxu0 0
          %2924 = vmatpush1.bf16.msra.mxu0 %v2820
          %2925 = vmatprep.mubr.bf16.mxu0 %v2589
          %2926 = vmatmul.mubr.bf16.gmra.mrb[0].mxu0 %v2588
          %v2927 = vpop.f32.mrb[0].mxu0
          %v2928 = vadd.f32 %v2888, %v2927
          %v2929 = vpop.f32.mrb[0].mxu0
          %v2930 = vpop.f32.mrb[0].mxu0
          %v2931 = vpop.f32.mrb[0].mxu0
          %2932 = vdwg.mxu0
          %2933 = vst [vmem:[%s332] sm:$0xf] %v2928
        $region64: #{critic_forward_pallas.1} parent=39 // pred_fallthru
          _
        %p2934 = scmp.lt.s32.totalorder %s25, 0
        %s2935 = scalar_select %p2934, %s25, 0
        %s2936 = smul.addr %s2935, 4
        %s2937 = scalar_lea.vmem %s5, %s2936
        // Predicated region
        $region65: #{critic_forward_pallas.1} parent=39 // pred_check
          %p2938 = pneg %p168
        $region66: #{critic_forward_pallas.1} parent=39 // pred_check_branch
          %2940 = sbr.rel (%p2938) target = $region68
        $region67: #{critic_forward_pallas.1} parent=39 // pred_region
          _
        $region68: #{critic_forward_pallas.1} parent=39 // pred_fallthru
          _
        // Predicated region
        $region69: #{critic_forward_pallas.1} parent=39 // pred_check
          %p2941 = pneg %p168
        $region70: #{critic_forward_pallas.1} parent=39 // pred_check_branch
          %2943 = sbr.rel (%p2941) target = $region72
        $region71: #{critic_forward_pallas.1} parent=39 // pred_region
          %p2944 = scmp.lt.s32.totalorder %s25, 0
          %s2945 = scalar_select %p2944, %s25, 0
          %s2946 = smul.addr %s2945, 4
          %s2947 = scalar_lea.vmem %s5, %s2946
        $region72: #{critic_forward_pallas.1} parent=39 // pred_fallthru
          _
      $region40: #{critic_forward_pallas.1} parent=5 // pred_fallthru
        _
      %p2948 = scmp.le.s32.totalorder 2, %s16
      // Predicated region
      $region73: #{critic_forward_pallas.1} parent=5 // pred_check
        %p2949 = pneg %p2948
      $region74: #{critic_forward_pallas.1} parent=5 // pred_check_branch
        %2951 = sbr.rel (%p2949) target = $region76
      $region75: #{critic_forward_pallas.1} parent=5 // pred_region
        %s2952 = ssub.s32 %s16, 2
      $region76: #{critic_forward_pallas.1} parent=5 // pred_fallthru
        _
    $region6: #{critic_forward_pallas.1} parent=1 // loop_footer
      %s20 = sadd.s32 1, %s16
    $region7: #{critic_forward_pallas.1} parent=1 // loop_footer_branch
      %15 = sbr.rel target = $region3
    $region8: #{critic_forward_pallas.1} parent=1 // loop_exit
      _
    %2953 = vsyncpa [#allocation4], 1
    %s2954 = scalar_lea.sflag [#allocation4], 1
    %2955 = vsyncpa %s2954, 1
    %2956 = vsyncpa [#allocation6], 1
    %2957 = vsyncpa [#allocation9], 1

</llo_original>
